<compile_context>
chip_gen: v7x
topology: tpu7x:2x2x1
jax: 0.10.0
libtpu: 0.0.40
codegen_flags: <defaults>
</compile_context>

<pallas_src>
import functools

import jax
import jax.numpy as jnp
from jax.experimental import pallas as pl
from jax.experimental.pallas import tpu as pltpu

_EPS = 1e-5
_LANES = 128


def _round_up(x, m):
    return ((x + m - 1) // m) * m


def _vmem_limit_bytes():
    """Generation-aware scoped-VMEM budget (v5e/v6e 128 MiB, v7x 64 MiB/TC)."""
    cap = 64 * 1024 * 1024
    try:
        info = pltpu.get_tpu_info()
        cap = int(getattr(info, "vmem_capacity_bytes", cap))
    except Exception:
        pass
    return max(32 * 1024 * 1024, min(cap // 2, 64 * 1024 * 1024))


def _compiler_params():
    return pltpu.CompilerParams(
        dimension_semantics=("parallel",),      # batch axis -> v7x 2-TC sharding
        vmem_limit_bytes=_vmem_limit_bytes())


# ----------------------------------------------------------------------------
# In-kernel 3x3 conv from an in-VMEM (phase-split) padded NHWC image block.
# ----------------------------------------------------------------------------
def _conv3x3_acc(xph_ref, w_ref, *, stride, ho, wo, cin, cpad):
    """Nine accumulated MXU matmuls over unit-stride taps -> (ho*wo, cpad) f32.

    xph_ref : (1, s*s, Hk, Wk, cin) bf16   phase-split spatially padded image
    w_ref   : (9, cin, cpad)        bf16   tap weights, Cout zero-padded
    """
    m = ho * wo
    acc = jnp.zeros((m, cpad), jnp.float32)
    for kh in range(3):
        for kw in range(3):
            ph = (kh % stride) * stride + (kw % stride)
            oh, ow = kh // stride, kw // stride
            tap = xph_ref[0, ph, oh:oh + ho, ow:ow + wo, :]       # (ho, wo, cin)
            acc = acc + jnp.dot(tap.reshape(m, cin), w_ref[kh * 3 + kw],
                                preferred_element_type=jnp.float32)
    return acc


def _conv_stats_kernel(xph_ref, w_ref, stats_ref, *, stride, ho, wo, cin, cpad):
    """Pass 1: conv (never stored) + per-image BN stats [sum ; centered M2]."""
    acc = _conv3x3_acc(xph_ref, w_ref, stride=stride, ho=ho, wo=wo,
                       cin=cin, cpad=cpad)
    m = ho * wo
    s = jnp.sum(acc, axis=0, keepdims=True)                       # (1, cpad)
    d = acc - s * (1.0 / m)                                       # mean-centered
    stats_ref[0, 0:1, :] = s
    stats_ref[0, 1:2, :] = jnp.sum(d * d, axis=0, keepdims=True)


def _conv_bn_relu_kernel(xph_ref, w_ref, scale_ref, shift_ref, o_ref, *,
                         stride, ho, wo, cin, cpad):
    """Pass 2: out = relu(conv(x) * scale + shift), stored bf16 lane-dense."""
    acc = _conv3x3_acc(xph_ref, w_ref, stride=stride, ho=ho, wo=wo,
                       cin=cin, cpad=cpad)
    y = jnp.maximum(acc * scale_ref[...] + shift_ref[...], 0.0)
    o_ref[...] = y.reshape(1, ho, wo, cpad).astype(o_ref.dtype)


def _conv_bn_add_relu_kernel(xph_ref, w_ref, scale_ref, shift_ref, sc_ref,
                             o_ref, *, stride, ho, wo, cin, cpad, planes):
    """Pass 2: out = relu(conv(x) * scale + shift + shortcut).

    The shortcut arrives at its real channel count (bf16) and is zero-extended
    to cpad lanes in VMEM (no padded copy ever touches HBM).
    """
    acc = _conv3x3_acc(xph_ref, w_ref, stride=stride, ho=ho, wo=wo,
                       cin=cin, cpad=cpad)
    y = acc * scale_ref[...] + shift_ref[...]
    sc = sc_ref[0].reshape(ho * wo, planes).astype(jnp.float32)
    if planes < cpad:
        sc = jnp.concatenate(
            [sc, jnp.zeros((ho * wo, cpad - planes), jnp.float32)], axis=-1)
    y = jnp.maximum(y + sc, 0.0)
    o_ref[...] = y.reshape(1, ho, wo, cpad).astype(o_ref.dtype)


# ----------------------------------------------------------------------------
# pallas_call wrappers (grid over the batch; one padded image block per step)
# ----------------------------------------------------------------------------
def _conv_stats(xph, w_taps, *, stride, ho, wo):
    n, ss, hk, wk, cin = xph.shape
    cpad = w_taps.shape[-1]
    kern = functools.partial(_conv_stats_kernel, stride=stride, ho=ho, wo=wo,
                             cin=cin, cpad=cpad)
    return pl.pallas_call(
        kern,
        out_shape=jax.ShapeDtypeStruct((n, 2, cpad), jnp.float32),
        grid=(n,),
        in_specs=[pl.BlockSpec((1, ss, hk, wk, cin),
                               lambda i: (i, 0, 0, 0, 0)),
                  pl.BlockSpec((9, cin, cpad), lambda i: (0, 0, 0))],
        out_specs=pl.BlockSpec((1, 2, cpad), lambda i: (i, 0, 0)),
        compiler_params=_compiler_params(),
    )(xph, w_taps)


def _conv_apply(xph, w_taps, scale, shift, shortcut=None, *, stride, ho, wo):
    n, ss, hk, wk, cin = xph.shape
    cpad = w_taps.shape[-1]

    # rough per-step working set (double-buffered blocks + f32 accumulator)
    step_bytes = (2 * ss * hk * wk * cin * 2 + 2 * ho * wo * cpad * 2 +
                  2 * 9 * cin * cpad * 2 + ho * wo * cpad * 4)
    assert step_bytes * 2 < _vmem_limit_bytes(), (
        "per-image working set too large for VMEM; "
        "TODO(synk): spatial-tile the image with a halo DMA")

    in_specs = [pl.BlockSpec((1, ss, hk, wk, cin), lambda i: (i, 0, 0, 0, 0)),
                pl.BlockSpec((9, cin, cpad), lambda i: (0, 0, 0)),
                pl.BlockSpec((1, cpad), lambda i: (0, 0)),
                pl.BlockSpec((1, cpad), lambda i: (0, 0))]
    out_specs = pl.BlockSpec((1, ho, wo, cpad), lambda i: (i, 0, 0, 0))
    out_shape = jax.ShapeDtypeStruct((n, ho, wo, cpad), jnp.bfloat16)

    if shortcut is None:
        kern = functools.partial(_conv_bn_relu_kernel, stride=stride, ho=ho,
                                 wo=wo, cin=cin, cpad=cpad)
        args = (xph, w_taps, scale, shift)
    else:
        planes = shortcut.shape[-1]
        kern = functools.partial(_conv_bn_add_relu_kernel, stride=stride, ho=ho,
                                 wo=wo, cin=cin, cpad=cpad, planes=planes)
        in_specs.append(pl.BlockSpec((1, ho, wo, planes),
                                     lambda i: (i, 0, 0, 0)))
        args = (xph, w_taps, scale, shift, shortcut)

    return pl.pallas_call(
        kern, out_shape=out_shape, grid=(n,),
        in_specs=in_specs, out_specs=out_specs,
        compiler_params=_compiler_params(),
    )(*args)


# ----------------------------------------------------------------------------
# XLA-side layout plumbing (activation-sized, bf16; no 9x im2col)
# ----------------------------------------------------------------------------
def _pad_and_phase_split(x_nhwc_bf16, stride):
    """Spatial pad=1 and, for stride 2, an even/odd phase split.

    Returns (N, s*s, Hk, Wk, C) bf16 so the kernel only uses unit-stride taps.
    """
    n, h, w, c = x_nhwc_bf16.shape
    xp = jnp.pad(x_nhwc_bf16, ((0, 0), (1, 1), (1, 1), (0, 0)))
    if stride == 1:
        return xp[:, None], h, w
    assert stride == 2 and h % 2 == 0 and w % 2 == 0, "stride-2 needs even H,W"
    phases = [xp[:, a::2, b::2, :] for a in (0, 1) for b in (0, 1)]
    return jnp.stack(phases, axis=1), h // 2, w // 2


def _bn_scale_shift(stats, m_per_image, gamma, beta):
    """Chan-combine per-image (sum, centered-M2) -> BN scale/shift (1, Cpad)."""
    n = stats.shape[0]
    m_total = float(n * m_per_image)
    sums = stats[:, 0, :]
    m2s = stats[:, 1, :]
    mean = jnp.sum(sums, axis=0) / m_total
    mu_i = sums / float(m_per_image)
    m2 = jnp.sum(m2s, axis=0) + float(m_per_image) * jnp.sum(
        (mu_i - mean[None, :]) ** 2, axis=0)
    var = jnp.maximum(m2 / m_total, 0.0)
    scale = gamma * jax.lax.rsqrt(var + _EPS)[None, :]
    shift = beta - mean[None, :] * scale
    return scale, shift


# ----------------------------------------------------------------------------
# BasicBlock module
# ----------------------------------------------------------------------------
class BasicBlockPallas:
    expansion = 1

    def __init__(self, in_planes, net_signals, id, counter, planes,
                 stride=1, option='A', *, key):
        assert option == 'A', "only option 'A' (CIFAR paper) implemented"
        self.in_planes = in_planes
        self.planes = planes
        self.stride = stride
        self.id = id
        self.counter = counter
        self.net_signals = net_signals
        self.cpad = _round_up(planes, _LANES)

        k1, k2 = jax.random.split(key)
        bound1 = (1.0 / (in_planes * 9)) ** 0.5
        bound2 = (1.0 / (planes * 9)) ** 0.5
        self.w1_hwio = jax.random.uniform(k1, (3, 3, in_planes, planes),
                                          minval=-bound1, maxval=bound1,
                                          dtype=jnp.float32)
        self.w2_hwio = jax.random.uniform(k2, (3, 3, planes, planes),
                                          minval=-bound2, maxval=bound2,
                                          dtype=jnp.float32)
        self.w1 = self._pack_weight(self.w1_hwio)   # (9, in_planes, Cpad) bf16
        self.w2 = self._pack_weight(self.w2_hwio)   # (9, planes,    Cpad) bf16

        # BatchNorm2d default init (weight=1, bias=0); zeros in padded lanes so
        # padded output channels stay exactly 0 through BN and ReLU.
        self.gamma1 = self._pad_ch(jnp.ones((planes,), jnp.float32))
        self.beta1 = self._pad_ch(jnp.zeros((planes,), jnp.float32))
        self.gamma2 = self._pad_ch(jnp.ones((planes,), jnp.float32))
        self.beta2 = self._pad_ch(jnp.zeros((planes,), jnp.float32))

    def _pad_ch(self, v):
        return jnp.pad(v, (0, self.cpad - self.planes))[None, :]

    def _pack_weight(self, w_hwio):
        kh, kw, cin, cout = w_hwio.shape
        w = w_hwio.reshape(kh * kw, cin, cout)
        w = jnp.pad(w, ((0, 0), (0, 0), (0, self.cpad - cout)))
        return w.astype(jnp.bfloat16)

    def _shortcut(self, x_nhwc):
        """Option 'A': identity, or ::2 spatial subsample + zero channel pad."""
        if self.stride == 1 and self.in_planes == self.planes:
            return x_nhwc
        pad = self.planes // 4
        sc = x_nhwc[:, ::2, ::2, :]
        return jnp.pad(sc, ((0, 0), (0, 0), (0, 0), (pad, pad)))

    def forward_nhwc(self, x_nhwc):
        """(N, H, W, in_planes) -> (N, Ho, Wo, planes); activations are bf16."""
        x = x_nhwc.astype(jnp.bfloat16)

        # conv1 -> bn1 (training-mode batch stats) -> relu
        xph1, ho, wo = _pad_and_phase_split(x, self.stride)
        stats1 = _conv_stats(xph1, self.w1, stride=self.stride, ho=ho, wo=wo)
        scale1, shift1 = _bn_scale_shift(stats1, ho * wo, self.gamma1, self.beta1)
        out1 = _conv_apply(xph1, self.w1, scale1, shift1,
                           stride=self.stride, ho=ho, wo=wo)[..., :self.planes]
        self.net_signals[f'layer{self.id}.{self.counter}.conv1'] = \
            jnp.transpose(out1, (0, 3, 1, 2)).astype(jnp.float32)

        # conv2 -> bn2 -> (+ shortcut) -> relu
        xph2, _, _ = _pad_and_phase_split(out1, 1)
        sc = self._shortcut(x)                        # (N, Ho, Wo, planes) bf16
        stats2 = _conv_stats(xph2, self.w2, stride=1, ho=ho, wo=wo)
        scale2, shift2 = _bn_scale_shift(stats2, ho * wo, self.gamma2, self.beta2)
        out2 = _conv_apply(xph2, self.w2, scale2, shift2, shortcut=sc,
                           stride=1, ho=ho, wo=wo)[..., :self.planes]
        self.net_signals[f'layer{self.id}.{self.counter}.conv2'] = \
            jnp.transpose(out2, (0, 3, 1, 2)).astype(jnp.float32)
        return out2

    def __call__(self, x_nchw):
        # PyTorch-compatible NCHW boundary; internal compute is NHWC bf16.
        y = self.forward_nhwc(jnp.transpose(x_nchw, (0, 2, 3, 1)))
        return jnp.transpose(y, (0, 3, 1, 2))


# ----------------------------------------------------------------------------
# Pure-JAX reference (same bf16 rounding points) for validation
# ----------------------------------------------------------------------------
def _bf16(a):
    return a.astype(jnp.bfloat16).astype(jnp.float32)


def _ref_basic_block(x_nhwc, blk):
    x = _bf16(x_nhwc)

    def conv(inp, w, stride):
        return jax.lax.conv_general_dilated(
            inp, _bf16(w), window_strides=(stride, stride),
            padding=((1, 1), (1, 1)),
            dimension_numbers=('NHWC', 'HWIO', 'NHWC'))

    def bn(y, gamma, beta):
        mean = jnp.mean(y, axis=(0, 1, 2), keepdims=True)
        var = jnp.mean((y - mean) ** 2, axis=(0, 1, 2), keepdims=True)
        return (y - mean) * jax.lax.rsqrt(var + _EPS) * gamma + beta

    p = blk.planes
    out1 = _bf16(jax.nn.relu(bn(conv(x, blk.w1_hwio, blk.stride),
                                blk.gamma1[0, :p], blk.beta1[0, :p])))
    sc = blk._shortcut(x.astype(jnp.bfloat16)).astype(jnp.float32)
    out2 = jax.nn.relu(bn(conv(out1, blk.w2_hwio, 1),
                          blk.gamma2[0, :p], blk.beta2[0, :p]) + sc)
    return _bf16(out2)


# ----------------------------------------------------------------------------
if __name__ == "__main__":
    key = jax.random.PRNGKey(0)
    kx, kb1, kb2 = jax.random.split(key, 3)

    # small shapes: batch=2, in_planes=4, spatial=16  (NCHW like PyTorch)
    x = jax.random.normal(kx, (2, 4, 16, 16), dtype=jnp.float32)

    signals = {}
    # downsampling block with option-A shortcut (4 -> 8 planes, stride 2)
    blk_down = BasicBlockPallas(4, signals, id=2, counter=0, planes=8,
                                stride=2, option='A', key=kb1)
    # identity-shortcut block (stride 1, planes == in_planes)
    blk_id = BasicBlockPallas(8, signals, id=2, counter=1, planes=8,
                              stride=1, option='A', key=kb2)

    x_nhwc = jnp.transpose(x, (0, 2, 3, 1))
    y_nhwc = blk_down.forward_nhwc(x_nhwc)           # (2, 8, 8, 8) NHWC bf16
    z_nhwc = blk_id.forward_nhwc(y_nhwc)             # (2, 8, 8, 8) NHWC bf16
    y = jnp.transpose(y_nhwc, (0, 3, 1, 2))          # NCHW
    z = jnp.transpose(z_nhwc, (0, 3, 1, 2))          # NCHW
    jax.block_until_ready((y, z))

    assert y.shape == (2, 8, 8, 8) and z.shape == (2, 8, 8, 8)
    for k in ('layer2.0.conv1', 'layer2.0.conv2',
              'layer2.1.conv1', 'layer2.1.conv2'):
        assert k in signals

    # per-block numerical check against the pure-JAX reference
    y_ref = _ref_basic_block(x_nhwc, blk_down)
    z_ref = _ref_basic_block(y_nhwc.astype(jnp.float32), blk_id)
    dy = jnp.abs(y_nhwc.astype(jnp.float32) - y_ref)
    dz = jnp.abs(z_nhwc.astype(jnp.float32) - z_ref)
    err_y, err_z = float(jnp.max(dy)), float(jnp.max(dz))
    mean_y, mean_z = float(jnp.mean(dy)), float(jnp.mean(dz))
    assert err_y < 1e-1 and err_z < 1e-1, (err_y, err_z)
    assert mean_y < 1e-2 and mean_z < 1e-2, (mean_y, mean_z)

    print("KERNEL_OK")
</pallas_src>

<mosaic_0001>
module attributes {stable_mosaic.version = 11 : i64} {
  func.func @_conv_stats_kernel(%arg0: i32, %arg1: memref<1x4x9x9x4xbf16, #tpu.memory_space<vmem>>, %arg2: memref<9x4x128xbf16, #tpu.memory_space<vmem>>, %arg3: memref<1x2x128xf32, #tpu.memory_space<vmem>>) attributes {dimension_semantics = [#tpu.dimension_semantics<parallel>], iteration_bounds = array<i64: 2>, scalar_prefetch = 0 : i64, scratch_operands = 0 : i64, tpu.core_type = #tpu.core_type<tc>, window_params = [{transform_indices = @transform_0, window_bounds = array<i64: 1, 4, 9, 9, 4>}, {pipeline_mode = #tpu.pipeline_mode<synchronous>, transform_indices = @transform_1, window_bounds = array<i64: 9, 4, 128>}, {transform_indices = @transform_2, window_bounds = array<i64: 1, 2, 128>}]} {
    %cst = arith.constant 0.000000e+00 : f32
    %0 = vector.broadcast %cst : f32 to vector<64x128xf32>
    %c0 = arith.constant 0 : index
    %c0_0 = arith.constant 0 : index
    %c0_1 = arith.constant 0 : index
    %c0_2 = arith.constant 0 : index
    %c0_3 = arith.constant 0 : index
    %1 = vector.load %arg1[%c0, %c0_0, %c0_1, %c0_2, %c0_3] : memref<1x4x9x9x4xbf16, #tpu.memory_space<vmem>>, vector<1x1x8x8x4xbf16>
    %2 = vector.shape_cast %1 : vector<1x1x8x8x4xbf16> to vector<8x8x4xbf16>
    %3 = vector.shape_cast %2 : vector<8x8x4xbf16> to vector<64x4xbf16>
    %c0_4 = arith.constant 0 : index
    %c0_5 = arith.constant 0 : index
    %c0_6 = arith.constant 0 : index
    %4 = vector.load %arg2[%c0_4, %c0_5, %c0_6] : memref<9x4x128xbf16, #tpu.memory_space<vmem>>, vector<1x4x128xbf16>
    %5 = vector.shape_cast %4 : vector<1x4x128xbf16> to vector<4x128xbf16>
    %cst_7 = arith.constant dense<0.000000e+00> : vector<64x128xf32>
    %6 = tpu.matmul %3, %5, %cst_7 {dimension_numbers = #tpu.dot_dimension_numbers<[1], [0], [0], [1], [0, 0, 1, 1], [], []>} : vector<64x4xbf16>, vector<4x128xbf16>, vector<64x128xf32> -> vector<64x128xf32>
    %7 = arith.addf %0, %6 : vector<64x128xf32>
    %c0_8 = arith.constant 0 : index
    %c1 = arith.constant 1 : index
    %c0_9 = arith.constant 0 : index
    %c0_10 = arith.constant 0 : index
    %c0_11 = arith.constant 0 : index
    %8 = vector.load %arg1[%c0_8, %c1, %c0_9, %c0_10, %c0_11] : memref<1x4x9x9x4xbf16, #tpu.memory_space<vmem>>, vector<1x1x8x8x4xbf16>
    %9 = vector.shape_cast %8 : vector<1x1x8x8x4xbf16> to vector<8x8x4xbf16>
    %10 = vector.shape_cast %9 : vector<8x8x4xbf16> to vector<64x4xbf16>
    %c1_12 = arith.constant 1 : index
    %c0_13 = arith.constant 0 : index
    %c0_14 = arith.constant 0 : index
    %11 = vector.load %arg2[%c1_12, %c0_13, %c0_14] : memref<9x4x128xbf16, #tpu.memory_space<vmem>>, vector<1x4x128xbf16>
    %12 = vector.shape_cast %11 : vector<1x4x128xbf16> to vector<4x128xbf16>
    %cst_15 = arith.constant dense<0.000000e+00> : vector<64x128xf32>
    %13 = tpu.matmul %10, %12, %cst_15 {dimension_numbers = #tpu.dot_dimension_numbers<[1], [0], [0], [1], [0, 0, 1, 1], [], []>} : vector<64x4xbf16>, vector<4x128xbf16>, vector<64x128xf32> -> vector<64x128xf32>
    %14 = arith.addf %7, %13 : vector<64x128xf32>
    %c0_16 = arith.constant 0 : index
    %c0_17 = arith.constant 0 : index
    %c0_18 = arith.constant 0 : index
    %c1_19 = arith.constant 1 : index
    %c0_20 = arith.constant 0 : index
    %15 = vector.load %arg1[%c0_16, %c0_17, %c0_18, %c1_19, %c0_20] : memref<1x4x9x9x4xbf16, #tpu.memory_space<vmem>>, vector<1x1x8x8x4xbf16>
    %16 = vector.shape_cast %15 : vector<1x1x8x8x4xbf16> to vector<8x8x4xbf16>
    %17 = vector.shape_cast %16 : vector<8x8x4xbf16> to vector<64x4xbf16>
    %c2 = arith.constant 2 : index
    %c0_21 = arith.constant 0 : index
    %c0_22 = arith.constant 0 : index
    %18 = vector.load %arg2[%c2, %c0_21, %c0_22] : memref<9x4x128xbf16, #tpu.memory_space<vmem>>, vector<1x4x128xbf16>
    %19 = vector.shape_cast %18 : vector<1x4x128xbf16> to vector<4x128xbf16>
    %cst_23 = arith.constant dense<0.000000e+00> : vector<64x128xf32>
    %20 = tpu.matmul %17, %19, %cst_23 {dimension_numbers = #tpu.dot_dimension_numbers<[1], [0], [0], [1], [0, 0, 1, 1], [], []>} : vector<64x4xbf16>, vector<4x128xbf16>, vector<64x128xf32> -> vector<64x128xf32>
    %21 = arith.addf %14, %20 : vector<64x128xf32>
    %c0_24 = arith.constant 0 : index
    %c2_25 = arith.constant 2 : index
    %c0_26 = arith.constant 0 : index
    %c0_27 = arith.constant 0 : index
    %c0_28 = arith.constant 0 : index
    %22 = vector.load %arg1[%c0_24, %c2_25, %c0_26, %c0_27, %c0_28] : memref<1x4x9x9x4xbf16, #tpu.memory_space<vmem>>, vector<1x1x8x8x4xbf16>
    %23 = vector.shape_cast %22 : vector<1x1x8x8x4xbf16> to vector<8x8x4xbf16>
    %24 = vector.shape_cast %23 : vector<8x8x4xbf16> to vector<64x4xbf16>
    %c3 = arith.constant 3 : index
    %c0_29 = arith.constant 0 : index
    %c0_30 = arith.constant 0 : index
    %25 = vector.load %arg2[%c3, %c0_29, %c0_30] : memref<9x4x128xbf16, #tpu.memory_space<vmem>>, vector<1x4x128xbf16>
    %26 = vector.shape_cast %25 : vector<1x4x128xbf16> to vector<4x128xbf16>
    %cst_31 = arith.constant dense<0.000000e+00> : vector<64x128xf32>
    %27 = tpu.matmul %24, %26, %cst_31 {dimension_numbers = #tpu.dot_dimension_numbers<[1], [0], [0], [1], [0, 0, 1, 1], [], []>} : vector<64x4xbf16>, vector<4x128xbf16>, vector<64x128xf32> -> vector<64x128xf32>
    %28 = arith.addf %21, %27 : vector<64x128xf32>
    %c0_32 = arith.constant 0 : index
    %c3_33 = arith.constant 3 : index
    %c0_34 = arith.constant 0 : index
    %c0_35 = arith.constant 0 : index
    %c0_36 = arith.constant 0 : index
    %29 = vector.load %arg1[%c0_32, %c3_33, %c0_34, %c0_35, %c0_36] : memref<1x4x9x9x4xbf16, #tpu.memory_space<vmem>>, vector<1x1x8x8x4xbf16>
    %30 = vector.shape_cast %29 : vector<1x1x8x8x4xbf16> to vector<8x8x4xbf16>
    %31 = vector.shape_cast %30 : vector<8x8x4xbf16> to vector<64x4xbf16>
    %c4 = arith.constant 4 : index
    %c0_37 = arith.constant 0 : index
    %c0_38 = arith.constant 0 : index
    %32 = vector.load %arg2[%c4, %c0_37, %c0_38] : memref<9x4x128xbf16, #tpu.memory_space<vmem>>, vector<1x4x128xbf16>
    %33 = vector.shape_cast %32 : vector<1x4x128xbf16> to vector<4x128xbf16>
    %cst_39 = arith.constant dense<0.000000e+00> : vector<64x128xf32>
    %34 = tpu.matmul %31, %33, %cst_39 {dimension_numbers = #tpu.dot_dimension_numbers<[1], [0], [0], [1], [0, 0, 1, 1], [], []>} : vector<64x4xbf16>, vector<4x128xbf16>, vector<64x128xf32> -> vector<64x128xf32>
    %35 = arith.addf %28, %34 : vector<64x128xf32>
    %c0_40 = arith.constant 0 : index
    %c2_41 = arith.constant 2 : index
    %c0_42 = arith.constant 0 : index
    %c1_43 = arith.constant 1 : index
    %c0_44 = arith.constant 0 : index
    %36 = vector.load %arg1[%c0_40, %c2_41, %c0_42, %c1_43, %c0_44] : memref<1x4x9x9x4xbf16, #tpu.memory_space<vmem>>, vector<1x1x8x8x4xbf16>
    %37 = vector.shape_cast %36 : vector<1x1x8x8x4xbf16> to vector<8x8x4xbf16>
    %38 = vector.shape_cast %37 : vector<8x8x4xbf16> to vector<64x4xbf16>
    %c5 = arith.constant 5 : index
    %c0_45 = arith.constant 0 : index
    %c0_46 = arith.constant 0 : index
    %39 = vector.load %arg2[%c5, %c0_45, %c0_46] : memref<9x4x128xbf16, #tpu.memory_space<vmem>>, vector<1x4x128xbf16>
    %40 = vector.shape_cast %39 : vector<1x4x128xbf16> to vector<4x128xbf16>
    %cst_47 = arith.constant dense<0.000000e+00> : vector<64x128xf32>
    %41 = tpu.matmul %38, %40, %cst_47 {dimension_numbers = #tpu.dot_dimension_numbers<[1], [0], [0], [1], [0, 0, 1, 1], [], []>} : vector<64x4xbf16>, vector<4x128xbf16>, vector<64x128xf32> -> vector<64x128xf32>
    %42 = arith.addf %35, %41 : vector<64x128xf32>
    %c0_48 = arith.constant 0 : index
    %c0_49 = arith.constant 0 : index
    %c1_50 = arith.constant 1 : index
    %c0_51 = arith.constant 0 : index
    %c0_52 = arith.constant 0 : index
    %43 = vector.load %arg1[%c0_48, %c0_49, %c1_50, %c0_51, %c0_52] : memref<1x4x9x9x4xbf16, #tpu.memory_space<vmem>>, vector<1x1x8x8x4xbf16>
    %44 = vector.shape_cast %43 : vector<1x1x8x8x4xbf16> to vector<8x8x4xbf16>
    %45 = vector.shape_cast %44 : vector<8x8x4xbf16> to vector<64x4xbf16>
    %c6 = arith.constant 6 : index
    %c0_53 = arith.constant 0 : index
    %c0_54 = arith.constant 0 : index
    %46 = vector.load %arg2[%c6, %c0_53, %c0_54] : memref<9x4x128xbf16, #tpu.memory_space<vmem>>, vector<1x4x128xbf16>
    %47 = vector.shape_cast %46 : vector<1x4x128xbf16> to vector<4x128xbf16>
    %cst_55 = arith.constant dense<0.000000e+00> : vector<64x128xf32>
    %48 = tpu.matmul %45, %47, %cst_55 {dimension_numbers = #tpu.dot_dimension_numbers<[1], [0], [0], [1], [0, 0, 1, 1], [], []>} : vector<64x4xbf16>, vector<4x128xbf16>, vector<64x128xf32> -> vector<64x128xf32>
    %49 = arith.addf %42, %48 : vector<64x128xf32>
    %c0_56 = arith.constant 0 : index
    %c1_57 = arith.constant 1 : index
    %c1_58 = arith.constant 1 : index
    %c0_59 = arith.constant 0 : index
    %c0_60 = arith.constant 0 : index
    %50 = vector.load %arg1[%c0_56, %c1_57, %c1_58, %c0_59, %c0_60] : memref<1x4x9x9x4xbf16, #tpu.memory_space<vmem>>, vector<1x1x8x8x4xbf16>
    %51 = vector.shape_cast %50 : vector<1x1x8x8x4xbf16> to vector<8x8x4xbf16>
    %52 = vector.shape_cast %51 : vector<8x8x4xbf16> to vector<64x4xbf16>
    %c7 = arith.constant 7 : index
    %c0_61 = arith.constant 0 : index
    %c0_62 = arith.constant 0 : index
    %53 = vector.load %arg2[%c7, %c0_61, %c0_62] : memref<9x4x128xbf16, #tpu.memory_space<vmem>>, vector<1x4x128xbf16>
    %54 = vector.shape_cast %53 : vector<1x4x128xbf16> to vector<4x128xbf16>
    %cst_63 = arith.constant dense<0.000000e+00> : vector<64x128xf32>
    %55 = tpu.matmul %52, %54, %cst_63 {dimension_numbers = #tpu.dot_dimension_numbers<[1], [0], [0], [1], [0, 0, 1, 1], [], []>} : vector<64x4xbf16>, vector<4x128xbf16>, vector<64x128xf32> -> vector<64x128xf32>
    %56 = arith.addf %49, %55 : vector<64x128xf32>
    %c0_64 = arith.constant 0 : index
    %c0_65 = arith.constant 0 : index
    %c1_66 = arith.constant 1 : index
    %c1_67 = arith.constant 1 : index
    %c0_68 = arith.constant 0 : index
    %57 = vector.load %arg1[%c0_64, %c0_65, %c1_66, %c1_67, %c0_68] : memref<1x4x9x9x4xbf16, #tpu.memory_space<vmem>>, vector<1x1x8x8x4xbf16>
    %58 = vector.shape_cast %57 : vector<1x1x8x8x4xbf16> to vector<8x8x4xbf16>
    %59 = vector.shape_cast %58 : vector<8x8x4xbf16> to vector<64x4xbf16>
    %c8 = arith.constant 8 : index
    %c0_69 = arith.constant 0 : index
    %c0_70 = arith.constant 0 : index
    %60 = vector.load %arg2[%c8, %c0_69, %c0_70] : memref<9x4x128xbf16, #tpu.memory_space<vmem>>, vector<1x4x128xbf16>
    %61 = vector.shape_cast %60 : vector<1x4x128xbf16> to vector<4x128xbf16>
    %cst_71 = arith.constant dense<0.000000e+00> : vector<64x128xf32>
    %62 = tpu.matmul %59, %61, %cst_71 {dimension_numbers = #tpu.dot_dimension_numbers<[1], [0], [0], [1], [0, 0, 1, 1], [], []>} : vector<64x4xbf16>, vector<4x128xbf16>, vector<64x128xf32> -> vector<64x128xf32>
    %63 = arith.addf %56, %62 : vector<64x128xf32>
    %cst_72 = arith.constant dense<0.000000e+00> : vector<128xf32>
    %64 = vector.multi_reduction <add>, %63, %cst_72 [0] : vector<64x128xf32> to vector<128xf32>
    %65 = vector.shape_cast %64 : vector<128xf32> to vector<1x128xf32>
    %cst_73 = arith.constant 1.562500e-02 : f32
    %66 = vector.broadcast %cst_73 : f32 to vector<1x128xf32>
    %67 = arith.mulf %65, %66 : vector<1x128xf32>
    %68 = vector.broadcast %67 : vector<1x128xf32> to vector<64x128xf32>
    %69 = arith.subf %63, %68 : vector<64x128xf32>
    %c0_74 = arith.constant 0 : index
    %c0_75 = arith.constant 0 : index
    %c0_76 = arith.constant 0 : index
    %70 = vector.load %arg3[%c0_74, %c0_75, %c0_76] : memref<1x2x128xf32, #tpu.memory_space<vmem>>, vector<1x1x128xf32>
    %71 = vector.shape_cast %70 : vector<1x1x128xf32> to vector<1x128xf32>
    %72 = vector.shape_cast %65 : vector<1x128xf32> to vector<1x1x128xf32>
    tpu.vector_store %arg3[%c0_74, %c0_75, %c0_76], %72 {strides = array<i32>} : memref<1x2x128xf32, #tpu.memory_space<vmem>>, vector<1x1x128xf32>,
    %73 = arith.mulf %69, %69 : vector<64x128xf32>
    %cst_77 = arith.constant dense<0.000000e+00> : vector<128xf32>
    %74 = vector.multi_reduction <add>, %73, %cst_77 [0] : vector<64x128xf32> to vector<128xf32>
    %75 = vector.shape_cast %74 : vector<128xf32> to vector<1x128xf32>
    %c0_78 = arith.constant 0 : index
    %c1_79 = arith.constant 1 : index
    %c0_80 = arith.constant 0 : index
    %76 = vector.load %arg3[%c0_78, %c1_79, %c0_80] : memref<1x2x128xf32, #tpu.memory_space<vmem>>, vector<1x1x128xf32>
    %77 = vector.shape_cast %76 : vector<1x1x128xf32> to vector<1x128xf32>
    %78 = vector.shape_cast %75 : vector<1x128xf32> to vector<1x1x128xf32>
    tpu.vector_store %arg3[%c0_78, %c1_79, %c0_80], %78 {strides = array<i32>} : memref<1x2x128xf32, #tpu.memory_space<vmem>>, vector<1x1x128xf32>,
    return
  }
  func.func @transform_0(%arg0: i32) -> (i32, i32, i32, i32, i32) {
    %c0_i32 = arith.constant 0 : i32
    %c0_i32_0 = arith.constant 0 : i32
    %c0_i32_1 = arith.constant 0 : i32
    %c0_i32_2 = arith.constant 0 : i32
    %c0_i32_3 = arith.constant 0 : i32
    return %arg0, %c0_i32, %c0_i32_0, %c0_i32_1, %c0_i32_2 : i32, i32, i32, i32, i32
  }
  func.func @transform_1(%arg0: i32) -> (i32, i32, i32) {
    %c0_i32 = arith.constant 0 : i32
    %c0_i32_0 = arith.constant 0 : i32
    %c0_i32_1 = arith.constant 0 : i32
    %c0_i32_2 = arith.constant 0 : i32
    return %c0_i32, %c0_i32_0, %c0_i32_1 : i32, i32, i32
  }
  func.func @transform_2(%arg0: i32) -> (i32, i32, i32) {
    %c0_i32 = arith.constant 0 : i32
    %c0_i32_0 = arith.constant 0 : i32
    %c0_i32_1 = arith.constant 0 : i32
    return %arg0, %c0_i32, %c0_i32_0 : i32, i32, i32
  }
}

</mosaic_0001>

<llo_original>
// kernel: tpu_custom_call.1
$region0: #{tpu_custom_call.1}
  #allocation0 [shape = 'u32[]', space=smem, size = 0x4, offset = 0x4, fixed_abs, tag = 'smem constant byte address 0x4 - core index']
  #allocation1 [shape = 'u32[144,128]{1,0:T(1,128)}', space=vmem, size = 0x12000, scoped, tag = 'internal scratch']
  %s0 = inlined_call_operand.vmem [shape: bf16[2,4,9,9,4], index: 0, kind: input, shape index: {}]
  %s1 = inlined_call_operand.vmem [shape: bf16[9,4,128], index: 1, kind: input, shape index: {}]
  %s2 = inlined_call_operand.hbm [shape: f32[2,2,128], index: 2, kind: output, shape index: {}]
  %s3 = sld [smem:[#allocation0]]
  $region41: #{tpu_custom_call.1} parent=0
    _
  %s5 = ssub.s32 1, %s3
  %s6 = scalar_select 0, %s5, %s3
  $region1: #{tpu_custom_call.1} parent=0
    #allocation2 [shape = 'u8[2048]{0}', space=vmem, size = 0x800, scoped, tag = 'output window, operand 0']
    #allocation3 [shape = 's32[2]{0}', space=sflag, size = 0x8, scoped, tag = 'scoped memory for tpu_custom_call.1']
    %7 = vsyncpa [#allocation3], 0
    %s8 = scalar_lea.sflag [#allocation3], 1
    %9 = vsyncpa %s8, 0
    loop: start=0, step=1, limit=4
    $region2: #{tpu_custom_call.1} parent=1 // loop_pre_header
      _
    $region3: #{tpu_custom_call.1} parent=1 // loop_header
      %s11 = sphi 0, %s15
      %p12 = scmp.ge.s32.totalorder %s11, 4
      %s21 = sphi 0, %s23
      %s24 = sphi 0, %s21
      %s25 = sphi 0, %s24
      %s41 = sphi 0, %s25
      %s45 = sphi 0, %s45
      %s47 = sphi 0, %s45
      %s48 = sphi 0, %s47
      %s62 = sphi 0, %s48
      %s68 = sphi 0, %s70
      %s71 = sphi 0, %s68
      %s72 = sphi 0, %s71
      %s88 = sphi 0, %s72
    $region4: #{tpu_custom_call.1} parent=1 // loop_header_branch
      %14 = sbr.rel (%p12) target = $region8
    $region5: #{tpu_custom_call.1} parent=1 // loop_body
      %s16 = ssub.s32 %s11, 1
      %s17 = ssub.s32 %s11, 2
      %s18 = sadd.s32 %s11, 1
      %s19 = ssub.s32 %s11, %s18
      %p20 = scmp.eq.s32.totalorder %s19, 0
      %s22 = sadd.s32 %s21, 1
      %s23 = scalar_select %p20, %s21, %s22
      %p26 = pneg %p20
      %p27 = scmp.eq.s32.totalorder %s11, 1
      %p28 = por %p26, %p27
      %p29 = scmp.ne.s32.totalorder %s21, %s24
      %p30 = scmp.eq.s32.totalorder %s11, 0
      %p31 = por %p29, %p30
      %p32 = scmp.ne.s32.totalorder %s21, %s24
      %p33 = scmp.eq.s32.totalorder %s16, 1
      %p34 = por %p32, %p33
      %p35 = scmp.ne.s32.totalorder %s24, %s25
      %p36 = scmp.eq.s32.totalorder %s16, 0
      %p37 = por %p35, %p36
      %p38 = scmp.ne.s32.totalorder %s24, %s25
      %p39 = scmp.eq.s32.totalorder %s17, 1
      %p40 = por %p38, %p39
      %p42 = scmp.ne.s32.totalorder %s25, %s41
      %p43 = scmp.eq.s32.totalorder %s17, 0
      %p44 = por %p42, %p43
      %s46 = sadd.s32 %s45, 1
      %p49 = scmp.eq.s32.totalorder %s11, 1
      %p50 = scmp.ne.s32.totalorder %s45, %s47
      %p51 = scmp.eq.s32.totalorder %s11, 0
      %p52 = por %p50, %p51
      %p53 = scmp.ne.s32.totalorder %s45, %s47
      %p54 = scmp.eq.s32.totalorder %s16, 1
      %p55 = por %p53, %p54
      %p56 = scmp.ne.s32.totalorder %s47, %s48
      %p57 = scmp.eq.s32.totalorder %s16, 0
      %p58 = por %p56, %p57
      %p59 = scmp.ne.s32.totalorder %s47, %s48
      %p60 = scmp.eq.s32.totalorder %s17, 1
      %p61 = por %p59, %p60
      %p63 = scmp.ne.s32.totalorder %s48, %s62
      %p64 = scmp.eq.s32.totalorder %s17, 0
      %p65 = por %p63, %p64
      %s66 = ssub.s32 %s11, %s18
      %p67 = scmp.eq.s32.totalorder %s66, 0
      %s69 = sadd.s32 %s68, 1
      %s70 = scalar_select %p67, %s68, %s69
      %p73 = pneg %p67
      %p74 = scmp.eq.s32.totalorder %s11, 1
      %p75 = por %p73, %p74
      %p76 = scmp.ne.s32.totalorder %s68, %s71
      %p77 = scmp.eq.s32.totalorder %s11, 0
      %p78 = por %p76, %p77
      %p79 = scmp.ne.s32.totalorder %s68, %s71
      %p80 = scmp.eq.s32.totalorder %s16, 1
      %p81 = por %p79, %p80
      %p82 = scmp.ne.s32.totalorder %s71, %s72
      %p83 = scmp.eq.s32.totalorder %s16, 0
      %p84 = por %p82, %p83
      %p85 = scmp.ne.s32.totalorder %s71, %s72
      %p86 = scmp.eq.s32.totalorder %s17, 1
      %p87 = por %p85, %p86
      %p89 = scmp.ne.s32.totalorder %s72, %s88
      %p90 = scmp.eq.s32.totalorder %s17, 0
      %p91 = por %p89, %p90
      %p92 = scmp.le.s32.totalorder 1, %s11
      %p93 = scmp.lt.s32.totalorder %s11, 3
      %p94 = pnand %p92, %p93
      %p95 = pneg %p94
      // Predicated region
      $region9: #{tpu_custom_call.1} parent=5 // pred_check
        _
      $region10: #{tpu_custom_call.1} parent=5 // pred_check_branch
        %97 = sbr.rel (%p94) target = $region12
      $region11: #{tpu_custom_call.1} parent=5 // pred_region
        %s98 = ssub.s32 %s11, 1
        // Predicated region
        $region13: #{tpu_custom_call.1} parent=11 // pred_check
          %p99 = pneg %p58
        $region14: #{tpu_custom_call.1} parent=11 // pred_check_branch
          %101 = sbr.rel (%p99) target = $region16
        $region15: #{tpu_custom_call.1} parent=11 // pred_region
          _
        $region16: #{tpu_custom_call.1} parent=11 // pred_fallthru
          _
      $region12: #{tpu_custom_call.1} parent=5 // pred_fallthru
        _
      %p102 = scmp.lt.s32.totalorder %s11, 2
      // Predicated region
      $region17: #{tpu_custom_call.1} parent=5 // pred_check
        %p103 = pneg %p102
      $region18: #{tpu_custom_call.1} parent=5 // pred_check_branch
        %105 = sbr.rel (%p103) target = $region20
      $region19: #{tpu_custom_call.1} parent=5 // pred_region
        // Predicated region
        $region21: #{tpu_custom_call.1} parent=19 // pred_check
          %p106 = pneg %p31
        $region22: #{tpu_custom_call.1} parent=19 // pred_check_branch
          %108 = sbr.rel (%p106) target = $region24
        $region23: #{tpu_custom_call.1} parent=19 // pred_region
          %p109 = scmp.lt.s32.totalorder %s11, 1
          %s110 = scalar_select %p109, %s11, 1
          %s111 = smul.addr %s110, 72
          %s112 = smul.addr %s111, 4
          %s113 = scalar_lea.vmem %s0, %s112
        $region24: #{tpu_custom_call.1} parent=19 // pred_fallthru
          _
      $region20: #{tpu_custom_call.1} parent=5 // pred_fallthru
        _
      %p114 = scmp.le.s32.totalorder 1, %s11
      %p115 = scmp.lt.s32.totalorder %s11, 3
      %p116 = pnand %p114, %p115
      %p117 = pneg %p116
      // Predicated region
      $region25: #{tpu_custom_call.1} parent=5 // pred_check
        _
      $region26: #{tpu_custom_call.1} parent=5 // pred_check_branch
        %119 = sbr.rel (%p116) target = $region28
      $region27: #{tpu_custom_call.1} parent=5 // pred_region
        %s120 = ssub.s32 %s11, 1
        %p121 = scmp.lt.s32.totalorder %s16, 1
        %s122 = scalar_select %p121, %s16, 1
        %s123 = smul.addr %s122, 72
        %s124 = smul.addr %s123, 4
        %s125 = scalar_lea.vmem %s0, %s124
        %p126 = pneg %p37
        %p127 = pneg %p34
        %p128 = pneg %p58
        %p129 = pneg %p55
        %p130 = pneg %p84
        %p131 = pneg %p81
        %s132 = sand.u32 %s71, 1
        %s133 = scalar_lea.sflag [#allocation3], %s132
        %s134 = sand.u32 %s71, 1
        %s135 = smul.addr %s134, 2
        %s136 = scalar_lea.vmem [#allocation2], %s135
        %p137 = scmp.lt.s32.totalorder %s16, 1
        %s138 = scalar_select %p137, %s16, 1
        %s139 = smul.addr %s138, 72
        %s140 = smul.addr %s139, 4
        %s141 = scalar_lea.vmem %s0, %s140
        %v143 = vld [vmem:[%s141] sm:$0xf]
        %v144 = vld [vmem:[%s141 + $0x8] sm:$0xf]
        %v145 = vld [vmem:[%s141 + $0x10] sm:$0xf]
        %v146 = vld [vmem:[%s141 + $0x18] sm:$0xf]
        %v147 = vld [vmem:[%s141 + $0x20] sm:$0xf]
        %v148 = vld [vmem:[%s141 + $0x28] sm:$0xf]
        %v149 = vld [vmem:[%s141 + $0x30] sm:$0xf]
        %v150 = vld [vmem:[%s141 + $0x38] sm:$0xf]
        %v151 = vld [vmem:[%s1] sm:$0x3]
        %s152 = scalar_lea.vmem %s141, 72
        %v153 = vld [vmem:[%s152] sm:$0xf]
        %v154 = vld [vmem:[%s152 + $0x8] sm:$0xf]
        %v155 = vld [vmem:[%s152 + $0x10] sm:$0xf]
        %v156 = vld [vmem:[%s152 + $0x18] sm:$0xf]
        %v157 = vld [vmem:[%s152 + $0x20] sm:$0xf]
        %v158 = vld [vmem:[%s152 + $0x28] sm:$0xf]
        %v159 = vld [vmem:[%s152 + $0x30] sm:$0xf]
        %v160 = vld [vmem:[%s152 + $0x38] sm:$0xf]
        %s161 = scalar_lea.vmem %s1, 2
        %v162 = vld [vmem:[%s161] sm:$0x3]
        %v171 = vunpack.c.l.b16 %v153
        %v172 = vunpack.c.l.b16 %v154
        %v173 = vunpack.c.l.b16 %v155
        %v174 = vunpack.c.l.b16 %v156
        %v175 = vunpack.c.l.b16 %v157
        %v176 = vunpack.c.l.b16 %v158
        %v177 = vunpack.c.l.b16 %v159
        %v178 = vunpack.c.l.b16 %v160
        %v179 = vpack.c.b16 %v172, %v171
        %v180 = vpack.c.b16 %v174, %v173
        %v181 = vpack.c.b16 %v176, %v175
        %v182 = vpack.c.b16 %v178, %v177
        %vm183 = vcmask 31744
        %v185 = vsel %vm183, %v179, 0
        %v188 = vsel %vm183, %v180, 0
        %v191 = vsel %vm183, %v181, 0
        %v194 = vsel %vm183, %v182, 0
        %vm196 = vcmask 1041408
        %v198 = vsel %vm196, %v162, 0
        %200 = vmatprep.subr.bf16.mxu0 0
        %201 = vmatpush1.bf16.msra.mxu0 %v198
        %202 = vmatprep.subr.bf16.mxu0 0
        %203 = vmatpush1.bf16.msra.mxu0 0
        %204 = vmatprep.subr.bf16.mxu0 0
        %205 = vmatpush1.bf16.msra.mxu0 0
        %206 = vmatprep.subr.bf16.mxu0 0
        %207 = vmatpush1.bf16.msra.mxu0 0
        %208 = vmatprep.subr.bf16.mxu0 0
        %209 = vmatpush1.bf16.msra.mxu0 0
        %210 = vmatprep.subr.bf16.mxu0 0
        %211 = vmatpush1.bf16.msra.mxu0 0
        %212 = vmatprep.subr.bf16.mxu0 0
        %213 = vmatpush1.bf16.msra.mxu0 0
        %214 = vmatprep.subr.bf16.mxu0 0
        %215 = vmatpush1.bf16.msra.mxu0 0
        %216 = vmatprep.subr.bf16.mxu0 0
        %217 = vmatpush1.bf16.msra.mxu0 0
        %218 = vmatprep.subr.bf16.mxu0 0
        %219 = vmatpush1.bf16.msra.mxu0 0
        %220 = vmatprep.subr.bf16.mxu0 0
        %221 = vmatpush1.bf16.msra.mxu0 0
        %222 = vmatprep.subr.bf16.mxu0 0
        %223 = vmatpush1.bf16.msra.mxu0 0
        %224 = vmatprep.subr.bf16.mxu0 0
        %225 = vmatpush1.bf16.msra.mxu0 0
        %226 = vmatprep.subr.bf16.mxu0 0
        %227 = vmatpush1.bf16.msra.mxu0 0
        %228 = vmatprep.subr.bf16.mxu0 0
        %229 = vmatpush1.bf16.msra.mxu0 0
        %230 = vmatprep.subr.bf16.mxu0 0
        %231 = vmatpush1.bf16.msra.mxu0 0
        %232 = vmatprep.mubr.bf16.mxu0 0
        %233 = vmatmul.mubr.bf16.gmra.mrb[0].mxu0 %v185
        %v234 = vpop.f32.mrb[0].mxu0
        %v235 = vadd.f32 0.0, %v234
        %v236 = vpop.f32.mrb[0].mxu0
        %v237 = vpop.f32.mrb[0].mxu0
        %v238 = vadd.f32 0.0, %v237
        %v239 = vpop.f32.mrb[0].mxu0
        %240 = vmatprep.mubr.bf16.mxu0 0
        %241 = vmatmul.mubr.bf16.gmra.mrb[0].mxu0 %v188
        %v242 = vpop.f32.mrb[0].mxu0
        %v243 = vadd.f32 0.0, %v242
        %v244 = vpop.f32.mrb[0].mxu0
        %v245 = vpop.f32.mrb[0].mxu0
        %v246 = vadd.f32 0.0, %v245
        %v247 = vpop.f32.mrb[0].mxu0
        %248 = vmatprep.mubr.bf16.mxu0 0
        %249 = vmatmul.mubr.bf16.gmra.mrb[0].mxu0 %v191
        %v250 = vpop.f32.mrb[0].mxu0
        %v251 = vadd.f32 0.0, %v250
        %v252 = vpop.f32.mrb[0].mxu0
        %v253 = vpop.f32.mrb[0].mxu0
        %v254 = vadd.f32 0.0, %v253
        %v255 = vpop.f32.mrb[0].mxu0
        %256 = vmatprep.mubr.bf16.mxu0 0
        %257 = vmatmul.mubr.bf16.gmra.mrb[0].mxu0 %v194
        %v258 = vpop.f32.mrb[0].mxu0
        %v259 = vadd.f32 0.0, %v258
        %v260 = vpop.f32.mrb[0].mxu0
        %v261 = vpop.f32.mrb[0].mxu0
        %v262 = vadd.f32 0.0, %v261
        %v263 = vpop.f32.mrb[0].mxu0
        %264 = vdwg.mxu0
        %v273 = vunpack.c.l.b16 %v143
        %v274 = vunpack.c.l.b16 %v144
        %v275 = vunpack.c.l.b16 %v145
        %v276 = vunpack.c.l.b16 %v146
        %v277 = vunpack.c.l.b16 %v147
        %v278 = vunpack.c.l.b16 %v148
        %v279 = vunpack.c.l.b16 %v149
        %v280 = vunpack.c.l.b16 %v150
        %v281 = vpack.c.b16 %v274, %v273
        %v282 = vpack.c.b16 %v276, %v275
        %v283 = vpack.c.b16 %v278, %v277
        %v284 = vpack.c.b16 %v280, %v279
        %v286 = vsel %vm183, %v281, 0
        %v289 = vsel %vm183, %v282, 0
        %v292 = vsel %vm183, %v283, 0
        %v295 = vsel %vm183, %v284, 0
        %v298 = vsel %vm196, %v151, 0
        %300 = vmatprep.subr.bf16.mxu0 0
        %301 = vmatpush1.bf16.msra.mxu0 %v298
        %302 = vmatprep.subr.bf16.mxu0 0
        %303 = vmatpush1.bf16.msra.mxu0 0
        %304 = vmatprep.subr.bf16.mxu0 0
        %305 = vmatpush1.bf16.msra.mxu0 0
        %306 = vmatprep.subr.bf16.mxu0 0
        %307 = vmatpush1.bf16.msra.mxu0 0
        %308 = vmatprep.subr.bf16.mxu0 0
        %309 = vmatpush1.bf16.msra.mxu0 0
        %310 = vmatprep.subr.bf16.mxu0 0
        %311 = vmatpush1.bf16.msra.mxu0 0
        %312 = vmatprep.subr.bf16.mxu0 0
        %313 = vmatpush1.bf16.msra.mxu0 0
        %314 = vmatprep.subr.bf16.mxu0 0
        %315 = vmatpush1.bf16.msra.mxu0 0
        %316 = vmatprep.subr.bf16.mxu0 0
        %317 = vmatpush1.bf16.msra.mxu0 0
        %318 = vmatprep.subr.bf16.mxu0 0
        %319 = vmatpush1.bf16.msra.mxu0 0
        %320 = vmatprep.subr.bf16.mxu0 0
        %321 = vmatpush1.bf16.msra.mxu0 0
        %322 = vmatprep.subr.bf16.mxu0 0
        %323 = vmatpush1.bf16.msra.mxu0 0
        %324 = vmatprep.subr.bf16.mxu0 0
        %325 = vmatpush1.bf16.msra.mxu0 0
        %326 = vmatprep.subr.bf16.mxu0 0
        %327 = vmatpush1.bf16.msra.mxu0 0
        %328 = vmatprep.subr.bf16.mxu0 0
        %329 = vmatpush1.bf16.msra.mxu0 0
        %330 = vmatprep.subr.bf16.mxu0 0
        %331 = vmatpush1.bf16.msra.mxu0 0
        %332 = vmatprep.mubr.bf16.mxu0 0
        %333 = vmatmul.mubr.bf16.gmra.mrb[0].mxu0 %v286
        %v334 = vpop.f32.mrb[0].mxu0
        %v335 = vadd.f32 %v235, %v334
        %v336 = vpop.f32.mrb[0].mxu0
        %v337 = vpop.f32.mrb[0].mxu0
        %v338 = vadd.f32 %v238, %v337
        %v339 = vpop.f32.mrb[0].mxu0
        %340 = vmatprep.mubr.bf16.mxu0 0
        %341 = vmatmul.mubr.bf16.gmra.mrb[0].mxu0 %v289
        %v342 = vpop.f32.mrb[0].mxu0
        %v343 = vadd.f32 %v243, %v342
        %v344 = vpop.f32.mrb[0].mxu0
        %v345 = vpop.f32.mrb[0].mxu0
        %v346 = vadd.f32 %v246, %v345
        %v347 = vpop.f32.mrb[0].mxu0
        %348 = vmatprep.mubr.bf16.mxu0 0
        %349 = vmatmul.mubr.bf16.gmra.mrb[0].mxu0 %v292
        %v350 = vpop.f32.mrb[0].mxu0
        %v351 = vadd.f32 %v251, %v350
        %v352 = vpop.f32.mrb[0].mxu0
        %v353 = vpop.f32.mrb[0].mxu0
        %v354 = vadd.f32 %v254, %v353
        %v355 = vpop.f32.mrb[0].mxu0
        %356 = vmatprep.mubr.bf16.mxu0 0
        %357 = vmatmul.mubr.bf16.gmra.mrb[0].mxu0 %v295
        %v358 = vpop.f32.mrb[0].mxu0
        %v359 = vadd.f32 %v259, %v358
        %v360 = vpop.f32.mrb[0].mxu0
        %v361 = vpop.f32.mrb[0].mxu0
        %v362 = vadd.f32 %v262, %v361
        %v363 = vpop.f32.mrb[0].mxu0
        %364 = vdwg.mxu0
        %v365 = vld [vmem:[%s141] sm:$0xf]
        %v366 = vld [vmem:[%s141 + $0x4] sm:$0x1]
        %v367 = vld [vmem:[%s141 + $0x8] sm:$0xf]
        %v368 = vld [vmem:[%s141 + $0xc] sm:$0x1]
        %v369 = vld [vmem:[%s141 + $0x10] sm:$0xf]
        %v370 = vld [vmem:[%s141 + $0x14] sm:$0x1]
        %v371 = vld [vmem:[%s141 + $0x18] sm:$0xf]
        %v372 = vld [vmem:[%s141 + $0x1c] sm:$0x1]
        %v373 = vld [vmem:[%s141 + $0x20] sm:$0xf]
        %v374 = vld [vmem:[%s141 + $0x24] sm:$0x1]
        %v375 = vld [vmem:[%s141 + $0x28] sm:$0xf]
        %v376 = vld [vmem:[%s141 + $0x2c] sm:$0x1]
        %v377 = vld [vmem:[%s141 + $0x30] sm:$0xf]
        %v378 = vld [vmem:[%s141 + $0x34] sm:$0x1]
        %v379 = vld [vmem:[%s141 + $0x38] sm:$0xf]
        %v380 = vld [vmem:[%s141 + $0x3c] sm:$0x1]
        %vm381 = vsmask.f32 3328
        %vm382 = vsmask.f32 7440
        %vm383 = vmor %vm381, %vm382
        %v385 = vshrl.u32 %v365, 16
        %v387 = vrot.slane %v385, 4
        %v388 = vshll.u32 %v365, 16
        %v390 = vrot.slane %v388, 5
        %v391 = vor.u32 %v387, %v390
        %v392 = vrot.slane %v391, 4
        %v394 = vshll.u32 %v366, 16
        %v396 = vrot.slane %v394, 5
        %v397 = vsel %vm383, %v392, %v396
        %v399 = vshrl.u32 %v367, 16
        %v401 = vrot.slane %v399, 4
        %v402 = vshll.u32 %v367, 16
        %v404 = vrot.slane %v402, 5
        %v405 = vor.u32 %v401, %v404
        %v406 = vrot.slane %v405, 4
        %v408 = vshll.u32 %v368, 16
        %v410 = vrot.slane %v408, 5
        %v411 = vsel %vm383, %v406, %v410
        %v413 = vshrl.u32 %v369, 16
        %v415 = vrot.slane %v413, 4
        %v416 = vshll.u32 %v369, 16
        %v418 = vrot.slane %v416, 5
        %v419 = vor.u32 %v415, %v418
        %v420 = vrot.slane %v419, 4
        %v422 = vshll.u32 %v370, 16
        %v424 = vrot.slane %v422, 5
        %v425 = vsel %vm383, %v420, %v424
        %v427 = vshrl.u32 %v371, 16
        %v429 = vrot.slane %v427, 4
        %v430 = vshll.u32 %v371, 16
        %v432 = vrot.slane %v430, 5
        %v433 = vor.u32 %v429, %v432
        %v434 = vrot.slane %v433, 4
        %v436 = vshll.u32 %v372, 16
        %v438 = vrot.slane %v436, 5
        %v439 = vsel %vm383, %v434, %v438
        %v441 = vshrl.u32 %v373, 16
        %v443 = vrot.slane %v441, 4
        %v444 = vshll.u32 %v373, 16
        %v446 = vrot.slane %v444, 5
        %v447 = vor.u32 %v443, %v446
        %v448 = vrot.slane %v447, 4
        %v450 = vshll.u32 %v374, 16
        %v452 = vrot.slane %v450, 5
        %v453 = vsel %vm383, %v448, %v452
        %v455 = vshrl.u32 %v375, 16
        %v457 = vrot.slane %v455, 4
        %v458 = vshll.u32 %v375, 16
        %v460 = vrot.slane %v458, 5
        %v461 = vor.u32 %v457, %v460
        %v462 = vrot.slane %v461, 4
        %v464 = vshll.u32 %v376, 16
        %v466 = vrot.slane %v464, 5
        %v467 = vsel %vm383, %v462, %v466
        %v469 = vshrl.u32 %v377, 16
        %v471 = vrot.slane %v469, 4
        %v472 = vshll.u32 %v377, 16
        %v474 = vrot.slane %v472, 5
        %v475 = vor.u32 %v471, %v474
        %v476 = vrot.slane %v475, 4
        %v478 = vshll.u32 %v378, 16
        %v480 = vrot.slane %v478, 5
        %v481 = vsel %vm383, %v476, %v480
        %v483 = vshrl.u32 %v379, 16
        %v485 = vrot.slane %v483, 4
        %v486 = vshll.u32 %v379, 16
        %v488 = vrot.slane %v486, 5
        %v489 = vor.u32 %v485, %v488
        %v490 = vrot.slane %v489, 4
        %v492 = vshll.u32 %v380, 16
        %v494 = vrot.slane %v492, 5
        %v495 = vsel %vm383, %v490, %v494
        %s496 = scalar_lea.vmem %s1, 4
        %v497 = vld [vmem:[%s496] sm:$0x3]
        %v498 = vunpack.c.l.b16 %v397
        %v499 = vunpack.c.l.b16 %v411
        %v500 = vunpack.c.l.b16 %v425
        %v501 = vunpack.c.l.b16 %v439
        %v502 = vunpack.c.l.b16 %v453
        %v503 = vunpack.c.l.b16 %v467
        %v504 = vunpack.c.l.b16 %v481
        %v505 = vunpack.c.l.b16 %v495
        %v506 = vpack.c.b16 %v499, %v498
        %v507 = vpack.c.b16 %v501, %v500
        %v508 = vpack.c.b16 %v503, %v502
        %v509 = vpack.c.b16 %v505, %v504
        %v511 = vsel %vm183, %v506, 0
        %v514 = vsel %vm183, %v507, 0
        %v517 = vsel %vm183, %v508, 0
        %v520 = vsel %vm183, %v509, 0
        %v523 = vsel %vm196, %v497, 0
        %525 = vmatprep.subr.bf16.mxu0 0
        %526 = vmatpush1.bf16.msra.mxu0 %v523
        %527 = vmatprep.subr.bf16.mxu0 0
        %528 = vmatpush1.bf16.msra.mxu0 0
        %529 = vmatprep.subr.bf16.mxu0 0
        %530 = vmatpush1.bf16.msra.mxu0 0
        %531 = vmatprep.subr.bf16.mxu0 0
        %532 = vmatpush1.bf16.msra.mxu0 0
        %533 = vmatprep.subr.bf16.mxu0 0
        %534 = vmatpush1.bf16.msra.mxu0 0
        %535 = vmatprep.subr.bf16.mxu0 0
        %536 = vmatpush1.bf16.msra.mxu0 0
        %537 = vmatprep.subr.bf16.mxu0 0
        %538 = vmatpush1.bf16.msra.mxu0 0
        %539 = vmatprep.subr.bf16.mxu0 0
        %540 = vmatpush1.bf16.msra.mxu0 0
        %541 = vmatprep.subr.bf16.mxu0 0
        %542 = vmatpush1.bf16.msra.mxu0 0
        %543 = vmatprep.subr.bf16.mxu0 0
        %544 = vmatpush1.bf16.msra.mxu0 0
        %545 = vmatprep.subr.bf16.mxu0 0
        %546 = vmatpush1.bf16.msra.mxu0 0
        %547 = vmatprep.subr.bf16.mxu0 0
        %548 = vmatpush1.bf16.msra.mxu0 0
        %549 = vmatprep.subr.bf16.mxu0 0
        %550 = vmatpush1.bf16.msra.mxu0 0
        %551 = vmatprep.subr.bf16.mxu0 0
        %552 = vmatpush1.bf16.msra.mxu0 0
        %553 = vmatprep.subr.bf16.mxu0 0
        %554 = vmatpush1.bf16.msra.mxu0 0
        %555 = vmatprep.subr.bf16.mxu0 0
        %556 = vmatpush1.bf16.msra.mxu0 0
        %557 = vmatprep.mubr.bf16.mxu0 0
        %558 = vmatmul.mubr.bf16.gmra.mrb[0].mxu0 %v511
        %v559 = vpop.f32.mrb[0].mxu0
        %v560 = vadd.f32 0.0, %v559
        %v561 = vpop.f32.mrb[0].mxu0
        %v562 = vpop.f32.mrb[0].mxu0
        %v563 = vadd.f32 0.0, %v562
        %v564 = vpop.f32.mrb[0].mxu0
        %565 = vmatprep.mubr.bf16.mxu0 0
        %566 = vmatmul.mubr.bf16.gmra.mrb[0].mxu0 %v514
        %v567 = vpop.f32.mrb[0].mxu0
        %v568 = vadd.f32 0.0, %v567
        %v569 = vpop.f32.mrb[0].mxu0
        %v570 = vpop.f32.mrb[0].mxu0
        %v571 = vadd.f32 0.0, %v570
        %v572 = vpop.f32.mrb[0].mxu0
        %573 = vmatprep.mubr.bf16.mxu0 0
        %574 = vmatmul.mubr.bf16.gmra.mrb[0].mxu0 %v517
        %v575 = vpop.f32.mrb[0].mxu0
        %v576 = vadd.f32 0.0, %v575
        %v577 = vpop.f32.mrb[0].mxu0
        %v578 = vpop.f32.mrb[0].mxu0
        %v579 = vadd.f32 0.0, %v578
        %v580 = vpop.f32.mrb[0].mxu0
        %581 = vmatprep.mubr.bf16.mxu0 0
        %582 = vmatmul.mubr.bf16.gmra.mrb[0].mxu0 %v520
        %v583 = vpop.f32.mrb[0].mxu0
        %v584 = vadd.f32 0.0, %v583
        %v585 = vpop.f32.mrb[0].mxu0
        %v586 = vpop.f32.mrb[0].mxu0
        %v587 = vadd.f32 0.0, %v586
        %v588 = vpop.f32.mrb[0].mxu0
        %589 = vdwg.mxu0
        %v590 = vadd.f32 %v335, %v560
        %v591 = vadd.f32 %v338, %v563
        %v592 = vadd.f32 %v343, %v568
        %v593 = vadd.f32 %v346, %v571
        %v594 = vadd.f32 %v351, %v576
        %v595 = vadd.f32 %v354, %v579
        %v596 = vadd.f32 %v359, %v584
        %v597 = vadd.f32 %v362, %v587
        %s598 = scalar_lea.vmem %s141, 144
        %v599 = vld [vmem:[%s598] sm:$0xf]
        %v600 = vld [vmem:[%s598 + $0x8] sm:$0xf]
        %v601 = vld [vmem:[%s598 + $0x10] sm:$0xf]
        %v602 = vld [vmem:[%s598 + $0x18] sm:$0xf]
        %v603 = vld [vmem:[%s598 + $0x20] sm:$0xf]
        %v604 = vld [vmem:[%s598 + $0x28] sm:$0xf]
        %v605 = vld [vmem:[%s598 + $0x30] sm:$0xf]
        %v606 = vld [vmem:[%s598 + $0x38] sm:$0xf]
        %s607 = scalar_lea.vmem %s1, 6
        %v608 = vld [vmem:[%s607] sm:$0x3]
        %v617 = vunpack.c.l.b16 %v599
        %v618 = vunpack.c.l.b16 %v600
        %v619 = vunpack.c.l.b16 %v601
        %v620 = vunpack.c.l.b16 %v602
        %v621 = vunpack.c.l.b16 %v603
        %v622 = vunpack.c.l.b16 %v604
        %v623 = vunpack.c.l.b16 %v605
        %v624 = vunpack.c.l.b16 %v606
        %v625 = vpack.c.b16 %v618, %v617
        %v626 = vpack.c.b16 %v620, %v619
        %v627 = vpack.c.b16 %v622, %v621
        %v628 = vpack.c.b16 %v624, %v623
        %v630 = vsel %vm183, %v625, 0
        %v633 = vsel %vm183, %v626, 0
        %v636 = vsel %vm183, %v627, 0
        %v639 = vsel %vm183, %v628, 0
        %v642 = vsel %vm196, %v608, 0
        %644 = vmatprep.subr.bf16.mxu0 0
        %645 = vmatpush1.bf16.msra.mxu0 %v642
        %646 = vmatprep.subr.bf16.mxu0 0
        %647 = vmatpush1.bf16.msra.mxu0 0
        %648 = vmatprep.subr.bf16.mxu0 0
        %649 = vmatpush1.bf16.msra.mxu0 0
        %650 = vmatprep.subr.bf16.mxu0 0
        %651 = vmatpush1.bf16.msra.mxu0 0
        %652 = vmatprep.subr.bf16.mxu0 0
        %653 = vmatpush1.bf16.msra.mxu0 0
        %654 = vmatprep.subr.bf16.mxu0 0
        %655 = vmatpush1.bf16.msra.mxu0 0
        %656 = vmatprep.subr.bf16.mxu0 0
        %657 = vmatpush1.bf16.msra.mxu0 0
        %658 = vmatprep.subr.bf16.mxu0 0
        %659 = vmatpush1.bf16.msra.mxu0 0
        %660 = vmatprep.subr.bf16.mxu0 0
        %661 = vmatpush1.bf16.msra.mxu0 0
        %662 = vmatprep.subr.bf16.mxu0 0
        %663 = vmatpush1.bf16.msra.mxu0 0
        %664 = vmatprep.subr.bf16.mxu0 0
        %665 = vmatpush1.bf16.msra.mxu0 0
        %666 = vmatprep.subr.bf16.mxu0 0
        %667 = vmatpush1.bf16.msra.mxu0 0
        %668 = vmatprep.subr.bf16.mxu0 0
        %669 = vmatpush1.bf16.msra.mxu0 0
        %670 = vmatprep.subr.bf16.mxu0 0
        %671 = vmatpush1.bf16.msra.mxu0 0
        %672 = vmatprep.subr.bf16.mxu0 0
        %673 = vmatpush1.bf16.msra.mxu0 0
        %674 = vmatprep.subr.bf16.mxu0 0
        %675 = vmatpush1.bf16.msra.mxu0 0
        %676 = vmatprep.mubr.bf16.mxu0 0
        %677 = vmatmul.mubr.bf16.gmra.mrb[0].mxu0 %v630
        %v678 = vpop.f32.mrb[0].mxu0
        %v679 = vadd.f32 0.0, %v678
        %v680 = vpop.f32.mrb[0].mxu0
        %v681 = vpop.f32.mrb[0].mxu0
        %v682 = vadd.f32 0.0, %v681
        %v683 = vpop.f32.mrb[0].mxu0
        %684 = vmatprep.mubr.bf16.mxu0 0
        %685 = vmatmul.mubr.bf16.gmra.mrb[0].mxu0 %v633
        %v686 = vpop.f32.mrb[0].mxu0
        %v687 = vadd.f32 0.0, %v686
        %v688 = vpop.f32.mrb[0].mxu0
        %v689 = vpop.f32.mrb[0].mxu0
        %v690 = vadd.f32 0.0, %v689
        %v691 = vpop.f32.mrb[0].mxu0
        %692 = vmatprep.mubr.bf16.mxu0 0
        %693 = vmatmul.mubr.bf16.gmra.mrb[0].mxu0 %v636
        %v694 = vpop.f32.mrb[0].mxu0
        %v695 = vadd.f32 0.0, %v694
        %v696 = vpop.f32.mrb[0].mxu0
        %v697 = vpop.f32.mrb[0].mxu0
        %v698 = vadd.f32 0.0, %v697
        %v699 = vpop.f32.mrb[0].mxu0
        %700 = vmatprep.mubr.bf16.mxu0 0
        %701 = vmatmul.mubr.bf16.gmra.mrb[0].mxu0 %v639
        %v702 = vpop.f32.mrb[0].mxu0
        %v703 = vadd.f32 0.0, %v702
        %v704 = vpop.f32.mrb[0].mxu0
        %v705 = vpop.f32.mrb[0].mxu0
        %v706 = vadd.f32 0.0, %v705
        %v707 = vpop.f32.mrb[0].mxu0
        %708 = vdwg.mxu0
        %v709 = vadd.f32 %v590, %v679
        %v710 = vadd.f32 %v591, %v682
        %v711 = vadd.f32 %v592, %v687
        %v712 = vadd.f32 %v593, %v690
        %v713 = vadd.f32 %v594, %v695
        %v714 = vadd.f32 %v595, %v698
        %v715 = vadd.f32 %v596, %v703
        %v716 = vadd.f32 %v597, %v706
        %s717 = scalar_lea.vmem %s141, 216
        %v718 = vld [vmem:[%s717] sm:$0xf]
        %v719 = vld [vmem:[%s717 + $0x8] sm:$0xf]
        %v720 = vld [vmem:[%s717 + $0x10] sm:$0xf]
        %v721 = vld [vmem:[%s717 + $0x18] sm:$0xf]
        %v722 = vld [vmem:[%s717 + $0x20] sm:$0xf]
        %v723 = vld [vmem:[%s717 + $0x28] sm:$0xf]
        %v724 = vld [vmem:[%s717 + $0x30] sm:$0xf]
        %v725 = vld [vmem:[%s717 + $0x38] sm:$0xf]
        %s726 = scalar_lea.vmem %s1, 8
        %v727 = vld [vmem:[%s726] sm:$0x3]
        %v736 = vunpack.c.l.b16 %v718
        %v737 = vunpack.c.l.b16 %v719
        %v738 = vunpack.c.l.b16 %v720
        %v739 = vunpack.c.l.b16 %v721
        %v740 = vunpack.c.l.b16 %v722
        %v741 = vunpack.c.l.b16 %v723
        %v742 = vunpack.c.l.b16 %v724
        %v743 = vunpack.c.l.b16 %v725
        %v744 = vpack.c.b16 %v737, %v736
        %v745 = vpack.c.b16 %v739, %v738
        %v746 = vpack.c.b16 %v741, %v740
        %v747 = vpack.c.b16 %v743, %v742
        %v749 = vsel %vm183, %v744, 0
        %v752 = vsel %vm183, %v745, 0
        %v755 = vsel %vm183, %v746, 0
        %v758 = vsel %vm183, %v747, 0
        %v761 = vsel %vm196, %v727, 0
        %763 = vmatprep.subr.bf16.mxu0 0
        %764 = vmatpush1.bf16.msra.mxu0 %v761
        %765 = vmatprep.subr.bf16.mxu0 0
        %766 = vmatpush1.bf16.msra.mxu0 0
        %767 = vmatprep.subr.bf16.mxu0 0
        %768 = vmatpush1.bf16.msra.mxu0 0
        %769 = vmatprep.subr.bf16.mxu0 0
        %770 = vmatpush1.bf16.msra.mxu0 0
        %771 = vmatprep.subr.bf16.mxu0 0
        %772 = vmatpush1.bf16.msra.mxu0 0
        %773 = vmatprep.subr.bf16.mxu0 0
        %774 = vmatpush1.bf16.msra.mxu0 0
        %775 = vmatprep.subr.bf16.mxu0 0
        %776 = vmatpush1.bf16.msra.mxu0 0
        %777 = vmatprep.subr.bf16.mxu0 0
        %778 = vmatpush1.bf16.msra.mxu0 0
        %779 = vmatprep.subr.bf16.mxu0 0
        %780 = vmatpush1.bf16.msra.mxu0 0
        %781 = vmatprep.subr.bf16.mxu0 0
        %782 = vmatpush1.bf16.msra.mxu0 0
        %783 = vmatprep.subr.bf16.mxu0 0
        %784 = vmatpush1.bf16.msra.mxu0 0
        %785 = vmatprep.subr.bf16.mxu0 0
        %786 = vmatpush1.bf16.msra.mxu0 0
        %787 = vmatprep.subr.bf16.mxu0 0
        %788 = vmatpush1.bf16.msra.mxu0 0
        %789 = vmatprep.subr.bf16.mxu0 0
        %790 = vmatpush1.bf16.msra.mxu0 0
        %791 = vmatprep.subr.bf16.mxu0 0
        %792 = vmatpush1.bf16.msra.mxu0 0
        %793 = vmatprep.subr.bf16.mxu0 0
        %794 = vmatpush1.bf16.msra.mxu0 0
        %795 = vmatprep.mubr.bf16.mxu0 0
        %796 = vmatmul.mubr.bf16.gmra.mrb[0].mxu0 %v749
        %v797 = vpop.f32.mrb[0].mxu0
        %v798 = vadd.f32 0.0, %v797
        %v799 = vpop.f32.mrb[0].mxu0
        %v800 = vpop.f32.mrb[0].mxu0
        %v801 = vadd.f32 0.0, %v800
        %v802 = vpop.f32.mrb[0].mxu0
        %803 = vmatprep.mubr.bf16.mxu0 0
        %804 = vmatmul.mubr.bf16.gmra.mrb[0].mxu0 %v752
        %v805 = vpop.f32.mrb[0].mxu0
        %v806 = vadd.f32 0.0, %v805
        %v807 = vpop.f32.mrb[0].mxu0
        %v808 = vpop.f32.mrb[0].mxu0
        %v809 = vadd.f32 0.0, %v808
        %v810 = vpop.f32.mrb[0].mxu0
        %811 = vmatprep.mubr.bf16.mxu0 0
        %812 = vmatmul.mubr.bf16.gmra.mrb[0].mxu0 %v755
        %v813 = vpop.f32.mrb[0].mxu0
        %v814 = vadd.f32 0.0, %v813
        %v815 = vpop.f32.mrb[0].mxu0
        %v816 = vpop.f32.mrb[0].mxu0
        %v817 = vadd.f32 0.0, %v816
        %v818 = vpop.f32.mrb[0].mxu0
        %819 = vmatprep.mubr.bf16.mxu0 0
        %820 = vmatmul.mubr.bf16.gmra.mrb[0].mxu0 %v758
        %v821 = vpop.f32.mrb[0].mxu0
        %v822 = vadd.f32 0.0, %v821
        %v823 = vpop.f32.mrb[0].mxu0
        %v824 = vpop.f32.mrb[0].mxu0
        %v825 = vadd.f32 0.0, %v824
        %v826 = vpop.f32.mrb[0].mxu0
        %827 = vdwg.mxu0
        %v828 = vadd.f32 %v709, %v798
        %v829 = vadd.f32 %v710, %v801
        %v830 = vadd.f32 %v711, %v806
        %v831 = vadd.f32 %v712, %v809
        %v832 = vadd.f32 %v713, %v814
        %v833 = vadd.f32 %v714, %v817
        %v834 = vadd.f32 %v715, %v822
        %v835 = vadd.f32 %v716, %v825
        %v836 = vld [vmem:[%s598] sm:$0xf]
        %v837 = vld [vmem:[%s598 + $0x4] sm:$0x1]
        %v838 = vld [vmem:[%s598 + $0x8] sm:$0xf]
        %v839 = vld [vmem:[%s598 + $0xc] sm:$0x1]
        %v840 = vld [vmem:[%s598 + $0x10] sm:$0xf]
        %v841 = vld [vmem:[%s598 + $0x14] sm:$0x1]
        %v842 = vld [vmem:[%s598 + $0x18] sm:$0xf]
        %v843 = vld [vmem:[%s598 + $0x1c] sm:$0x1]
        %v844 = vld [vmem:[%s598 + $0x20] sm:$0xf]
        %v845 = vld [vmem:[%s598 + $0x24] sm:$0x1]
        %v846 = vld [vmem:[%s598 + $0x28] sm:$0xf]
        %v847 = vld [vmem:[%s598 + $0x2c] sm:$0x1]
        %v848 = vld [vmem:[%s598 + $0x30] sm:$0xf]
        %v849 = vld [vmem:[%s598 + $0x34] sm:$0x1]
        %v850 = vld [vmem:[%s598 + $0x38] sm:$0xf]
        %v851 = vld [vmem:[%s598 + $0x3c] sm:$0x1]
        %v853 = vshrl.u32 %v836, 16
        %v855 = vrot.slane %v853, 4
        %v856 = vshll.u32 %v836, 16
        %v858 = vrot.slane %v856, 5
        %v859 = vor.u32 %v855, %v858
        %v860 = vrot.slane %v859, 4
        %v862 = vshll.u32 %v837, 16
        %v864 = vrot.slane %v862, 5
        %v865 = vsel %vm383, %v860, %v864
        %v867 = vshrl.u32 %v838, 16
        %v869 = vrot.slane %v867, 4
        %v870 = vshll.u32 %v838, 16
        %v872 = vrot.slane %v870, 5
        %v873 = vor.u32 %v869, %v872
        %v874 = vrot.slane %v873, 4
        %v876 = vshll.u32 %v839, 16
        %v878 = vrot.slane %v876, 5
        %v879 = vsel %vm383, %v874, %v878
        %v881 = vshrl.u32 %v840, 16
        %v883 = vrot.slane %v881, 4
        %v884 = vshll.u32 %v840, 16
        %v886 = vrot.slane %v884, 5
        %v887 = vor.u32 %v883, %v886
        %v888 = vrot.slane %v887, 4
        %v890 = vshll.u32 %v841, 16
        %v892 = vrot.slane %v890, 5
        %v893 = vsel %vm383, %v888, %v892
        %v895 = vshrl.u32 %v842, 16
        %v897 = vrot.slane %v895, 4
        %v898 = vshll.u32 %v842, 16
        %v900 = vrot.slane %v898, 5
        %v901 = vor.u32 %v897, %v900
        %v902 = vrot.slane %v901, 4
        %v904 = vshll.u32 %v843, 16
        %v906 = vrot.slane %v904, 5
        %v907 = vsel %vm383, %v902, %v906
        %v909 = vshrl.u32 %v844, 16
        %v911 = vrot.slane %v909, 4
        %v912 = vshll.u32 %v844, 16
        %v914 = vrot.slane %v912, 5
        %v915 = vor.u32 %v911, %v914
        %v916 = vrot.slane %v915, 4
        %v918 = vshll.u32 %v845, 16
        %v920 = vrot.slane %v918, 5
        %v921 = vsel %vm383, %v916, %v920
        %v923 = vshrl.u32 %v846, 16
        %v925 = vrot.slane %v923, 4
        %v926 = vshll.u32 %v846, 16
        %v928 = vrot.slane %v926, 5
        %v929 = vor.u32 %v925, %v928
        %v930 = vrot.slane %v929, 4
        %v932 = vshll.u32 %v847, 16
        %v934 = vrot.slane %v932, 5
        %v935 = vsel %vm383, %v930, %v934
        %v937 = vshrl.u32 %v848, 16
        %v939 = vrot.slane %v937, 4
        %v940 = vshll.u32 %v848, 16
        %v942 = vrot.slane %v940, 5
        %v943 = vor.u32 %v939, %v942
        %v944 = vrot.slane %v943, 4
        %v946 = vshll.u32 %v849, 16
        %v948 = vrot.slane %v946, 5
        %v949 = vsel %vm383, %v944, %v948
        %v951 = vshrl.u32 %v850, 16
        %v953 = vrot.slane %v951, 4
        %v954 = vshll.u32 %v850, 16
        %v956 = vrot.slane %v954, 5
        %v957 = vor.u32 %v953, %v956
        %v958 = vrot.slane %v957, 4
        %v960 = vshll.u32 %v851, 16
        %v962 = vrot.slane %v960, 5
        %v963 = vsel %vm383, %v958, %v962
        %s964 = scalar_lea.vmem %s1, 10
        %v965 = vld [vmem:[%s964] sm:$0x3]
        %v966 = vunpack.c.l.b16 %v865
        %v967 = vunpack.c.l.b16 %v879
        %v968 = vunpack.c.l.b16 %v893
        %v969 = vunpack.c.l.b16 %v907
        %v970 = vunpack.c.l.b16 %v921
        %v971 = vunpack.c.l.b16 %v935
        %v972 = vunpack.c.l.b16 %v949
        %v973 = vunpack.c.l.b16 %v963
        %v974 = vpack.c.b16 %v967, %v966
        %v975 = vpack.c.b16 %v969, %v968
        %v976 = vpack.c.b16 %v971, %v970
        %v977 = vpack.c.b16 %v973, %v972
        %v979 = vsel %vm183, %v974, 0
        %v982 = vsel %vm183, %v975, 0
        %v985 = vsel %vm183, %v976, 0
        %v988 = vsel %vm183, %v977, 0
        %v991 = vsel %vm196, %v965, 0
        %993 = vmatprep.subr.bf16.mxu0 0
        %994 = vmatpush1.bf16.msra.mxu0 %v991
        %995 = vmatprep.subr.bf16.mxu0 0
        %996 = vmatpush1.bf16.msra.mxu0 0
        %997 = vmatprep.subr.bf16.mxu0 0
        %998 = vmatpush1.bf16.msra.mxu0 0
        %999 = vmatprep.subr.bf16.mxu0 0
        %1000 = vmatpush1.bf16.msra.mxu0 0
        %1001 = vmatprep.subr.bf16.mxu0 0
        %1002 = vmatpush1.bf16.msra.mxu0 0
        %1003 = vmatprep.subr.bf16.mxu0 0
        %1004 = vmatpush1.bf16.msra.mxu0 0
        %1005 = vmatprep.subr.bf16.mxu0 0
        %1006 = vmatpush1.bf16.msra.mxu0 0
        %1007 = vmatprep.subr.bf16.mxu0 0
        %1008 = vmatpush1.bf16.msra.mxu0 0
        %1009 = vmatprep.subr.bf16.mxu0 0
        %1010 = vmatpush1.bf16.msra.mxu0 0
        %1011 = vmatprep.subr.bf16.mxu0 0
        %1012 = vmatpush1.bf16.msra.mxu0 0
        %1013 = vmatprep.subr.bf16.mxu0 0
        %1014 = vmatpush1.bf16.msra.mxu0 0
        %1015 = vmatprep.subr.bf16.mxu0 0
        %1016 = vmatpush1.bf16.msra.mxu0 0
        %1017 = vmatprep.subr.bf16.mxu0 0
        %1018 = vmatpush1.bf16.msra.mxu0 0
        %1019 = vmatprep.subr.bf16.mxu0 0
        %1020 = vmatpush1.bf16.msra.mxu0 0
        %1021 = vmatprep.subr.bf16.mxu0 0
        %1022 = vmatpush1.bf16.msra.mxu0 0
        %1023 = vmatprep.subr.bf16.mxu0 0
        %1024 = vmatpush1.bf16.msra.mxu0 0
        %1025 = vmatprep.mubr.bf16.mxu0 0
        %1026 = vmatmul.mubr.bf16.gmra.mrb[0].mxu0 %v979
        %v1027 = vpop.f32.mrb[0].mxu0
        %v1028 = vadd.f32 0.0, %v1027
        %v1029 = vpop.f32.mrb[0].mxu0
        %v1030 = vpop.f32.mrb[0].mxu0
        %v1031 = vadd.f32 0.0, %v1030
        %v1032 = vpop.f32.mrb[0].mxu0
        %1033 = vmatprep.mubr.bf16.mxu0 0
        %1034 = vmatmul.mubr.bf16.gmra.mrb[0].mxu0 %v982
        %v1035 = vpop.f32.mrb[0].mxu0
        %v1036 = vadd.f32 0.0, %v1035
        %v1037 = vpop.f32.mrb[0].mxu0
        %v1038 = vpop.f32.mrb[0].mxu0
        %v1039 = vadd.f32 0.0, %v1038
        %v1040 = vpop.f32.mrb[0].mxu0
        %1041 = vmatprep.mubr.bf16.mxu0 0
        %1042 = vmatmul.mubr.bf16.gmra.mrb[0].mxu0 %v985
        %v1043 = vpop.f32.mrb[0].mxu0
        %v1044 = vadd.f32 0.0, %v1043
        %v1045 = vpop.f32.mrb[0].mxu0
        %v1046 = vpop.f32.mrb[0].mxu0
        %v1047 = vadd.f32 0.0, %v1046
        %v1048 = vpop.f32.mrb[0].mxu0
        %1049 = vmatprep.mubr.bf16.mxu0 0
        %1050 = vmatmul.mubr.bf16.gmra.mrb[0].mxu0 %v988
        %v1051 = vpop.f32.mrb[0].mxu0
        %v1052 = vadd.f32 0.0, %v1051
        %v1053 = vpop.f32.mrb[0].mxu0
        %v1054 = vpop.f32.mrb[0].mxu0
        %v1055 = vadd.f32 0.0, %v1054
        %v1056 = vpop.f32.mrb[0].mxu0
        %1057 = vdwg.mxu0
        %v1058 = vadd.f32 %v828, %v1028
        %v1059 = vadd.f32 %v829, %v1031
        %v1060 = vadd.f32 %v830, %v1036
        %v1061 = vadd.f32 %v831, %v1039
        %v1062 = vadd.f32 %v832, %v1044
        %v1063 = vadd.f32 %v833, %v1047
        %v1064 = vadd.f32 %v834, %v1052
        %v1065 = vadd.f32 %v835, %v1055
        %s1066 = scalar_lea.vmem %s141, 8
        %v1067 = vld [vmem:[%s1066] sm:$0xf]
        %v1068 = vld [vmem:[%s1066 + $0x8] sm:$0xf]
        %v1069 = vld [vmem:[%s1066 + $0x10] sm:$0xf]
        %v1070 = vld [vmem:[%s1066 + $0x18] sm:$0xf]
        %v1071 = vld [vmem:[%s1066 + $0x20] sm:$0xf]
        %v1072 = vld [vmem:[%s1066 + $0x28] sm:$0xf]
        %v1073 = vld [vmem:[%s1066 + $0x30] sm:$0xf]
        %v1074 = vld [vmem:[%s1066 + $0x38] sm:$0xf]
        %s1075 = scalar_lea.vmem %s1, 12
        %v1076 = vld [vmem:[%s1075] sm:$0x3]
        %v1085 = vunpack.c.l.b16 %v1067
        %v1086 = vunpack.c.l.b16 %v1068
        %v1087 = vunpack.c.l.b16 %v1069
        %v1088 = vunpack.c.l.b16 %v1070
        %v1089 = vunpack.c.l.b16 %v1071
        %v1090 = vunpack.c.l.b16 %v1072
        %v1091 = vunpack.c.l.b16 %v1073
        %v1092 = vunpack.c.l.b16 %v1074
        %v1093 = vpack.c.b16 %v1086, %v1085
        %v1094 = vpack.c.b16 %v1088, %v1087
        %v1095 = vpack.c.b16 %v1090, %v1089
        %v1096 = vpack.c.b16 %v1092, %v1091
        %v1098 = vsel %vm183, %v1093, 0
        %v1101 = vsel %vm183, %v1094, 0
        %v1104 = vsel %vm183, %v1095, 0
        %v1107 = vsel %vm183, %v1096, 0
        %v1110 = vsel %vm196, %v1076, 0
        %1112 = vmatprep.subr.bf16.mxu0 0
        %1113 = vmatpush1.bf16.msra.mxu0 %v1110
        %1114 = vmatprep.subr.bf16.mxu0 0
        %1115 = vmatpush1.bf16.msra.mxu0 0
        %1116 = vmatprep.subr.bf16.mxu0 0
        %1117 = vmatpush1.bf16.msra.mxu0 0
        %1118 = vmatprep.subr.bf16.mxu0 0
        %1119 = vmatpush1.bf16.msra.mxu0 0
        %1120 = vmatprep.subr.bf16.mxu0 0
        %1121 = vmatpush1.bf16.msra.mxu0 0
        %1122 = vmatprep.subr.bf16.mxu0 0
        %1123 = vmatpush1.bf16.msra.mxu0 0
        %1124 = vmatprep.subr.bf16.mxu0 0
        %1125 = vmatpush1.bf16.msra.mxu0 0
        %1126 = vmatprep.subr.bf16.mxu0 0
        %1127 = vmatpush1.bf16.msra.mxu0 0
        %1128 = vmatprep.subr.bf16.mxu0 0
        %1129 = vmatpush1.bf16.msra.mxu0 0
        %1130 = vmatprep.subr.bf16.mxu0 0
        %1131 = vmatpush1.bf16.msra.mxu0 0
        %1132 = vmatprep.subr.bf16.mxu0 0
        %1133 = vmatpush1.bf16.msra.mxu0 0
        %1134 = vmatprep.subr.bf16.mxu0 0
        %1135 = vmatpush1.bf16.msra.mxu0 0
        %1136 = vmatprep.subr.bf16.mxu0 0
        %1137 = vmatpush1.bf16.msra.mxu0 0
        %1138 = vmatprep.subr.bf16.mxu0 0
        %1139 = vmatpush1.bf16.msra.mxu0 0
        %1140 = vmatprep.subr.bf16.mxu0 0
        %1141 = vmatpush1.bf16.msra.mxu0 0
        %1142 = vmatprep.subr.bf16.mxu0 0
        %1143 = vmatpush1.bf16.msra.mxu0 0
        %1144 = vmatprep.mubr.bf16.mxu0 0
        %1145 = vmatmul.mubr.bf16.gmra.mrb[0].mxu0 %v1098
        %v1146 = vpop.f32.mrb[0].mxu0
        %v1147 = vadd.f32 0.0, %v1146
        %v1148 = vpop.f32.mrb[0].mxu0
        %v1149 = vpop.f32.mrb[0].mxu0
        %v1150 = vadd.f32 0.0, %v1149
        %v1151 = vpop.f32.mrb[0].mxu0
        %1152 = vmatprep.mubr.bf16.mxu0 0
        %1153 = vmatmul.mubr.bf16.gmra.mrb[0].mxu0 %v1101
        %v1154 = vpop.f32.mrb[0].mxu0
        %v1155 = vadd.f32 0.0, %v1154
        %v1156 = vpop.f32.mrb[0].mxu0
        %v1157 = vpop.f32.mrb[0].mxu0
        %v1158 = vadd.f32 0.0, %v1157
        %v1159 = vpop.f32.mrb[0].mxu0
        %1160 = vmatprep.mubr.bf16.mxu0 0
        %1161 = vmatmul.mubr.bf16.gmra.mrb[0].mxu0 %v1104
        %v1162 = vpop.f32.mrb[0].mxu0
        %v1163 = vadd.f32 0.0, %v1162
        %v1164 = vpop.f32.mrb[0].mxu0
        %v1165 = vpop.f32.mrb[0].mxu0
        %v1166 = vadd.f32 0.0, %v1165
        %v1167 = vpop.f32.mrb[0].mxu0
        %1168 = vmatprep.mubr.bf16.mxu0 0
        %1169 = vmatmul.mubr.bf16.gmra.mrb[0].mxu0 %v1107
        %v1170 = vpop.f32.mrb[0].mxu0
        %v1171 = vadd.f32 0.0, %v1170
        %v1172 = vpop.f32.mrb[0].mxu0
        %v1173 = vpop.f32.mrb[0].mxu0
        %v1174 = vadd.f32 0.0, %v1173
        %v1175 = vpop.f32.mrb[0].mxu0
        %1176 = vdwg.mxu0
        %v1177 = vadd.f32 %v1058, %v1147
        %v1178 = vadd.f32 %v1059, %v1150
        %v1179 = vadd.f32 %v1060, %v1155
        %v1180 = vadd.f32 %v1061, %v1158
        %v1181 = vadd.f32 %v1062, %v1163
        %v1182 = vadd.f32 %v1063, %v1166
        %v1183 = vadd.f32 %v1064, %v1171
        %v1184 = vadd.f32 %v1065, %v1174
        %s1185 = scalar_lea.vmem %s141, 80
        %v1186 = vld [vmem:[%s1185] sm:$0xf]
        %v1187 = vld [vmem:[%s1185 + $0x8] sm:$0xf]
        %v1188 = vld [vmem:[%s1185 + $0x10] sm:$0xf]
        %v1189 = vld [vmem:[%s1185 + $0x18] sm:$0xf]
        %v1190 = vld [vmem:[%s1185 + $0x20] sm:$0xf]
        %v1191 = vld [vmem:[%s1185 + $0x28] sm:$0xf]
        %v1192 = vld [vmem:[%s1185 + $0x30] sm:$0xf]
        %v1193 = vld [vmem:[%s1185 + $0x38] sm:$0xf]
        %s1194 = scalar_lea.vmem %s1, 14
        %v1195 = vld [vmem:[%s1194] sm:$0x3]
        %v1204 = vunpack.c.l.b16 %v1186
        %v1205 = vunpack.c.l.b16 %v1187
        %v1206 = vunpack.c.l.b16 %v1188
        %v1207 = vunpack.c.l.b16 %v1189
        %v1208 = vunpack.c.l.b16 %v1190
        %v1209 = vunpack.c.l.b16 %v1191
        %v1210 = vunpack.c.l.b16 %v1192
        %v1211 = vunpack.c.l.b16 %v1193
        %v1212 = vpack.c.b16 %v1205, %v1204
        %v1213 = vpack.c.b16 %v1207, %v1206
        %v1214 = vpack.c.b16 %v1209, %v1208
        %v1215 = vpack.c.b16 %v1211, %v1210
        %v1217 = vsel %vm183, %v1212, 0
        %v1220 = vsel %vm183, %v1213, 0
        %v1223 = vsel %vm183, %v1214, 0
        %v1226 = vsel %vm183, %v1215, 0
        %v1229 = vsel %vm196, %v1195, 0
        %1231 = vmatprep.subr.bf16.mxu0 0
        %1232 = vmatpush1.bf16.msra.mxu0 %v1229
        %1233 = vmatprep.subr.bf16.mxu0 0
        %1234 = vmatpush1.bf16.msra.mxu0 0
        %1235 = vmatprep.subr.bf16.mxu0 0
        %1236 = vmatpush1.bf16.msra.mxu0 0
        %1237 = vmatprep.subr.bf16.mxu0 0
        %1238 = vmatpush1.bf16.msra.mxu0 0
        %1239 = vmatprep.subr.bf16.mxu0 0
        %1240 = vmatpush1.bf16.msra.mxu0 0
        %1241 = vmatprep.subr.bf16.mxu0 0
        %1242 = vmatpush1.bf16.msra.mxu0 0
        %1243 = vmatprep.subr.bf16.mxu0 0
        %1244 = vmatpush1.bf16.msra.mxu0 0
        %1245 = vmatprep.subr.bf16.mxu0 0
        %1246 = vmatpush1.bf16.msra.mxu0 0
        %1247 = vmatprep.subr.bf16.mxu0 0
        %1248 = vmatpush1.bf16.msra.mxu0 0
        %1249 = vmatprep.subr.bf16.mxu0 0
        %1250 = vmatpush1.bf16.msra.mxu0 0
        %1251 = vmatprep.subr.bf16.mxu0 0
        %1252 = vmatpush1.bf16.msra.mxu0 0
        %1253 = vmatprep.subr.bf16.mxu0 0
        %1254 = vmatpush1.bf16.msra.mxu0 0
        %1255 = vmatprep.subr.bf16.mxu0 0
        %1256 = vmatpush1.bf16.msra.mxu0 0
        %1257 = vmatprep.subr.bf16.mxu0 0
        %1258 = vmatpush1.bf16.msra.mxu0 0
        %1259 = vmatprep.subr.bf16.mxu0 0
        %1260 = vmatpush1.bf16.msra.mxu0 0
        %1261 = vmatprep.subr.bf16.mxu0 0
        %1262 = vmatpush1.bf16.msra.mxu0 0
        %1263 = vmatprep.mubr.bf16.mxu0 0
        %1264 = vmatmul.mubr.bf16.gmra.mrb[0].mxu0 %v1217
        %v1265 = vpop.f32.mrb[0].mxu0
        %v1266 = vadd.f32 0.0, %v1265
        %v1267 = vpop.f32.mrb[0].mxu0
        %v1268 = vpop.f32.mrb[0].mxu0
        %v1269 = vadd.f32 0.0, %v1268
        %v1270 = vpop.f32.mrb[0].mxu0
        %1271 = vmatprep.mubr.bf16.mxu0 0
        %1272 = vmatmul.mubr.bf16.gmra.mrb[0].mxu0 %v1220
        %v1273 = vpop.f32.mrb[0].mxu0
        %v1274 = vadd.f32 0.0, %v1273
        %v1275 = vpop.f32.mrb[0].mxu0
        %v1276 = vpop.f32.mrb[0].mxu0
        %v1277 = vadd.f32 0.0, %v1276
        %v1278 = vpop.f32.mrb[0].mxu0
        %1279 = vmatprep.mubr.bf16.mxu0 0
        %1280 = vmatmul.mubr.bf16.gmra.mrb[0].mxu0 %v1223
        %v1281 = vpop.f32.mrb[0].mxu0
        %v1282 = vadd.f32 0.0, %v1281
        %v1283 = vpop.f32.mrb[0].mxu0
        %v1284 = vpop.f32.mrb[0].mxu0
        %v1285 = vadd.f32 0.0, %v1284
        %v1286 = vpop.f32.mrb[0].mxu0
        %1287 = vmatprep.mubr.bf16.mxu0 0
        %1288 = vmatmul.mubr.bf16.gmra.mrb[0].mxu0 %v1226
        %v1289 = vpop.f32.mrb[0].mxu0
        %v1290 = vadd.f32 0.0, %v1289
        %v1291 = vpop.f32.mrb[0].mxu0
        %v1292 = vpop.f32.mrb[0].mxu0
        %v1293 = vadd.f32 0.0, %v1292
        %v1294 = vpop.f32.mrb[0].mxu0
        %1295 = vdwg.mxu0
        %v1296 = vadd.f32 %v1177, %v1266
        %v1297 = vadd.f32 %v1178, %v1269
        %v1298 = vadd.f32 %v1179, %v1274
        %v1299 = vadd.f32 %v1180, %v1277
        %v1300 = vadd.f32 %v1181, %v1282
        %v1301 = vadd.f32 %v1182, %v1285
        %v1302 = vadd.f32 %v1183, %v1290
        %v1303 = vadd.f32 %v1184, %v1293
        %v1304 = vld [vmem:[%s1066] sm:$0xf]
        %v1305 = vld [vmem:[%s1066 + $0x4] sm:$0x1]
        %v1306 = vld [vmem:[%s1066 + $0x8] sm:$0xf]
        %v1307 = vld [vmem:[%s1066 + $0xc] sm:$0x1]
        %v1308 = vld [vmem:[%s1066 + $0x10] sm:$0xf]
        %v1309 = vld [vmem:[%s1066 + $0x14] sm:$0x1]
        %v1310 = vld [vmem:[%s1066 + $0x18] sm:$0xf]
        %v1311 = vld [vmem:[%s1066 + $0x1c] sm:$0x1]
        %v1312 = vld [vmem:[%s1066 + $0x20] sm:$0xf]
        %v1313 = vld [vmem:[%s1066 + $0x24] sm:$0x1]
        %v1314 = vld [vmem:[%s1066 + $0x28] sm:$0xf]
        %v1315 = vld [vmem:[%s1066 + $0x2c] sm:$0x1]
        %v1316 = vld [vmem:[%s1066 + $0x30] sm:$0xf]
        %v1317 = vld [vmem:[%s1066 + $0x34] sm:$0x1]
        %v1318 = vld [vmem:[%s1066 + $0x38] sm:$0xf]
        %v1319 = vld [vmem:[%s1066 + $0x3c] sm:$0x1]
        %v1321 = vshrl.u32 %v1304, 16
        %v1323 = vrot.slane %v1321, 4
        %v1324 = vshll.u32 %v1304, 16
        %v1326 = vrot.slane %v1324, 5
        %v1327 = vor.u32 %v1323, %v1326
        %v1328 = vrot.slane %v1327, 4
        %v1330 = vshll.u32 %v1305, 16
        %v1332 = vrot.slane %v1330, 5
        %v1333 = vsel %vm383, %v1328, %v1332
        %v1335 = vshrl.u32 %v1306, 16
        %v1337 = vrot.slane %v1335, 4
        %v1338 = vshll.u32 %v1306, 16
        %v1340 = vrot.slane %v1338, 5
        %v1341 = vor.u32 %v1337, %v1340
        %v1342 = vrot.slane %v1341, 4
        %v1344 = vshll.u32 %v1307, 16
        %v1346 = vrot.slane %v1344, 5
        %v1347 = vsel %vm383, %v1342, %v1346
        %v1349 = vshrl.u32 %v1308, 16
        %v1351 = vrot.slane %v1349, 4
        %v1352 = vshll.u32 %v1308, 16
        %v1354 = vrot.slane %v1352, 5
        %v1355 = vor.u32 %v1351, %v1354
        %v1356 = vrot.slane %v1355, 4
        %v1358 = vshll.u32 %v1309, 16
        %v1360 = vrot.slane %v1358, 5
        %v1361 = vsel %vm383, %v1356, %v1360
        %v1363 = vshrl.u32 %v1310, 16
        %v1365 = vrot.slane %v1363, 4
        %v1366 = vshll.u32 %v1310, 16
        %v1368 = vrot.slane %v1366, 5
        %v1369 = vor.u32 %v1365, %v1368
        %v1370 = vrot.slane %v1369, 4
        %v1372 = vshll.u32 %v1311, 16
        %v1374 = vrot.slane %v1372, 5
        %v1375 = vsel %vm383, %v1370, %v1374
        %v1377 = vshrl.u32 %v1312, 16
        %v1379 = vrot.slane %v1377, 4
        %v1380 = vshll.u32 %v1312, 16
        %v1382 = vrot.slane %v1380, 5
        %v1383 = vor.u32 %v1379, %v1382
        %v1384 = vrot.slane %v1383, 4
        %v1386 = vshll.u32 %v1313, 16
        %v1388 = vrot.slane %v1386, 5
        %v1389 = vsel %vm383, %v1384, %v1388
        %v1391 = vshrl.u32 %v1314, 16
        %v1393 = vrot.slane %v1391, 4
        %v1394 = vshll.u32 %v1314, 16
        %v1396 = vrot.slane %v1394, 5
        %v1397 = vor.u32 %v1393, %v1396
        %v1398 = vrot.slane %v1397, 4
        %v1400 = vshll.u32 %v1315, 16
        %v1402 = vrot.slane %v1400, 5
        %v1403 = vsel %vm383, %v1398, %v1402
        %v1405 = vshrl.u32 %v1316, 16
        %v1407 = vrot.slane %v1405, 4
        %v1408 = vshll.u32 %v1316, 16
        %v1410 = vrot.slane %v1408, 5
        %v1411 = vor.u32 %v1407, %v1410
        %v1412 = vrot.slane %v1411, 4
        %v1414 = vshll.u32 %v1317, 16
        %v1416 = vrot.slane %v1414, 5
        %v1417 = vsel %vm383, %v1412, %v1416
        %v1419 = vshrl.u32 %v1318, 16
        %v1421 = vrot.slane %v1419, 4
        %v1422 = vshll.u32 %v1318, 16
        %v1424 = vrot.slane %v1422, 5
        %v1425 = vor.u32 %v1421, %v1424
        %v1426 = vrot.slane %v1425, 4
        %v1428 = vshll.u32 %v1319, 16
        %v1430 = vrot.slane %v1428, 5
        %v1431 = vsel %vm383, %v1426, %v1430
        %s1432 = scalar_lea.vmem %s1, 16
        %v1433 = vld [vmem:[%s1432] sm:$0x3]
        %v1434 = vunpack.c.l.b16 %v1333
        %v1435 = vunpack.c.l.b16 %v1347
        %v1436 = vunpack.c.l.b16 %v1361
        %v1437 = vunpack.c.l.b16 %v1375
        %v1438 = vunpack.c.l.b16 %v1389
        %v1439 = vunpack.c.l.b16 %v1403
        %v1440 = vunpack.c.l.b16 %v1417
        %v1441 = vunpack.c.l.b16 %v1431
        %v1442 = vpack.c.b16 %v1435, %v1434
        %v1443 = vpack.c.b16 %v1437, %v1436
        %v1444 = vpack.c.b16 %v1439, %v1438
        %v1445 = vpack.c.b16 %v1441, %v1440
        %v1447 = vsel %vm183, %v1442, 0
        %v1450 = vsel %vm183, %v1443, 0
        %v1453 = vsel %vm183, %v1444, 0
        %v1456 = vsel %vm183, %v1445, 0
        %v1459 = vsel %vm196, %v1433, 0
        %1461 = vmatprep.subr.bf16.mxu0 0
        %1462 = vmatpush1.bf16.msra.mxu0 %v1459
        %1463 = vmatprep.subr.bf16.mxu0 0
        %1464 = vmatpush1.bf16.msra.mxu0 0
        %1465 = vmatprep.subr.bf16.mxu0 0
        %1466 = vmatpush1.bf16.msra.mxu0 0
        %1467 = vmatprep.subr.bf16.mxu0 0
        %1468 = vmatpush1.bf16.msra.mxu0 0
        %1469 = vmatprep.subr.bf16.mxu0 0
        %1470 = vmatpush1.bf16.msra.mxu0 0
        %1471 = vmatprep.subr.bf16.mxu0 0
        %1472 = vmatpush1.bf16.msra.mxu0 0
        %1473 = vmatprep.subr.bf16.mxu0 0
        %1474 = vmatpush1.bf16.msra.mxu0 0
        %1475 = vmatprep.subr.bf16.mxu0 0
        %1476 = vmatpush1.bf16.msra.mxu0 0
        %1477 = vmatprep.subr.bf16.mxu0 0
        %1478 = vmatpush1.bf16.msra.mxu0 0
        %1479 = vmatprep.subr.bf16.mxu0 0
        %1480 = vmatpush1.bf16.msra.mxu0 0
        %1481 = vmatprep.subr.bf16.mxu0 0
        %1482 = vmatpush1.bf16.msra.mxu0 0
        %1483 = vmatprep.subr.bf16.mxu0 0
        %1484 = vmatpush1.bf16.msra.mxu0 0
        %1485 = vmatprep.subr.bf16.mxu0 0
        %1486 = vmatpush1.bf16.msra.mxu0 0
        %1487 = vmatprep.subr.bf16.mxu0 0
        %1488 = vmatpush1.bf16.msra.mxu0 0
        %1489 = vmatprep.subr.bf16.mxu0 0
        %1490 = vmatpush1.bf16.msra.mxu0 0
        %1491 = vmatprep.subr.bf16.mxu0 0
        %1492 = vmatpush1.bf16.msra.mxu0 0
        %1493 = vmatprep.mubr.bf16.mxu0 0
        %1494 = vmatmul.mubr.bf16.gmra.mrb[0].mxu0 %v1447
        %v1495 = vpop.f32.mrb[0].mxu0
        %v1496 = vadd.f32 0.0, %v1495
        %v1497 = vpop.f32.mrb[0].mxu0
        %v1498 = vpop.f32.mrb[0].mxu0
        %v1499 = vadd.f32 0.0, %v1498
        %v1500 = vpop.f32.mrb[0].mxu0
        %1501 = vmatprep.mubr.bf16.mxu0 0
        %1502 = vmatmul.mubr.bf16.gmra.mrb[0].mxu0 %v1450
        %v1503 = vpop.f32.mrb[0].mxu0
        %v1504 = vadd.f32 0.0, %v1503
        %v1505 = vpop.f32.mrb[0].mxu0
        %v1506 = vpop.f32.mrb[0].mxu0
        %v1507 = vadd.f32 0.0, %v1506
        %v1508 = vpop.f32.mrb[0].mxu0
        %1509 = vmatprep.mubr.bf16.mxu0 0
        %1510 = vmatmul.mubr.bf16.gmra.mrb[0].mxu0 %v1453
        %v1511 = vpop.f32.mrb[0].mxu0
        %v1512 = vadd.f32 0.0, %v1511
        %v1513 = vpop.f32.mrb[0].mxu0
        %v1514 = vpop.f32.mrb[0].mxu0
        %v1515 = vadd.f32 0.0, %v1514
        %v1516 = vpop.f32.mrb[0].mxu0
        %1517 = vmatprep.mubr.bf16.mxu0 0
        %1518 = vmatmul.mubr.bf16.gmra.mrb[0].mxu0 %v1456
        %v1519 = vpop.f32.mrb[0].mxu0
        %v1520 = vadd.f32 0.0, %v1519
        %v1521 = vpop.f32.mrb[0].mxu0
        %v1522 = vpop.f32.mrb[0].mxu0
        %v1523 = vadd.f32 0.0, %v1522
        %v1524 = vpop.f32.mrb[0].mxu0
        %1525 = vdwg.mxu0
        %v1526 = vadd.f32 %v1296, %v1496
        %v1527 = vadd.f32 %v1297, %v1499
        %v1528 = vadd.f32 %v1298, %v1504
        %v1529 = vadd.f32 %v1299, %v1507
        %v1530 = vadd.f32 %v1300, %v1512
        %v1531 = vadd.f32 %v1301, %v1515
        %v1532 = vadd.f32 %v1302, %v1520
        %v1533 = vadd.f32 %v1303, %v1523
        %v1534 = vadd.f32 %v1526, %v1527
        %v1535 = vadd.f32 %v1534, %v1528
        %v1536 = vadd.f32 %v1535, %v1529
        %v1537 = vadd.f32 %v1536, %v1530
        %v1538 = vadd.f32 %v1537, %v1531
        %v1539 = vadd.f32 %v1538, %v1532
        %v1540 = vadd.f32 %v1539, %v1533
        %v1541 = vrot.slane %v1540, 4
        %v1542 = vadd.f32 %v1540, %v1541
        %v1543 = vrot.slane %v1542, 2
        %v1544 = vadd.f32 %v1542, %v1543
        %v1545 = vrot.slane %v1544, 1
        %v1546 = vadd.f32 %v1544, %v1545
        %v1547 = vmul.f32 %v1546, 0.015625
        %v1548 = vsub.f32 %v1526, %v1547
        %v1549 = vsub.f32 %v1527, %v1547
        %v1550 = vsub.f32 %v1528, %v1547
        %v1551 = vsub.f32 %v1529, %v1547
        %v1552 = vsub.f32 %v1530, %v1547
        %v1553 = vsub.f32 %v1531, %v1547
        %v1554 = vsub.f32 %v1532, %v1547
        %v1555 = vsub.f32 %v1533, %v1547
        %1556 = vst [vmem:[%s136] sm:$0x1] %v1546
        %v1557 = vmul.f32 %v1548, %v1548
        %v1558 = vmul.f32 %v1549, %v1549
        %v1559 = vmul.f32 %v1550, %v1550
        %v1560 = vmul.f32 %v1551, %v1551
        %v1561 = vmul.f32 %v1552, %v1552
        %v1562 = vmul.f32 %v1553, %v1553
        %v1563 = vmul.f32 %v1554, %v1554
        %v1564 = vmul.f32 %v1555, %v1555
        %v1565 = vadd.f32 %v1557, %v1558
        %v1566 = vadd.f32 %v1565, %v1559
        %v1567 = vadd.f32 %v1566, %v1560
        %v1568 = vadd.f32 %v1567, %v1561
        %v1569 = vadd.f32 %v1568, %v1562
        %v1570 = vadd.f32 %v1569, %v1563
        %v1571 = vadd.f32 %v1570, %v1564
        %v1572 = vrot.slane %v1571, 4
        %v1573 = vadd.f32 %v1571, %v1572
        %v1574 = vrot.slane %v1573, 2
        %v1575 = vadd.f32 %v1573, %v1574
        %v1576 = vrot.slane %v1575, 1
        %v1577 = vadd.f32 %v1575, %v1576
        %1578 = vst [vmem:[%s136 + $0x1] sm:$0x1] %v1577
        %s1579 = sand.u32 %s71, 1
        %s1580 = scalar_lea.sflag [#allocation3], %s1579
        %s1581 = sand.u32 %s71, 1
        %s1582 = smul.addr %s1581, 2
        %s1583 = scalar_lea.vmem [#allocation2], %s1582
        // Predicated region
        $region29: #{tpu_custom_call.1} parent=27 // pred_check
          %p1584 = pneg %p81
        $region30: #{tpu_custom_call.1} parent=27 // pred_check_branch
          %1586 = sbr.rel (%p1584) target = $region32
        $region31: #{tpu_custom_call.1} parent=27 // pred_region
          %s1588 = ssub.s32 32, 32
          %1589 = vsyncadd %s1580, %s1588
          %s1590 = smul.addr %s16, 32
          %s1591 = scalar_lea.hbm %s2, %s1590
          %s1593 = sshll.u32 %s1583, 4
          %s1594 = int_to_ptr.vmem [resolvable:$true] %s1593
          %1596 = dma.vmem_to_hbm [thread:$0]  %s1594, 32, %s1591, %s1580
        $region32: #{tpu_custom_call.1} parent=27 // pred_fallthru
          _
      $region28: #{tpu_custom_call.1} parent=5 // pred_fallthru
        _
      %p1597 = scmp.le.s32.totalorder 2, %s11
      // Predicated region
      $region33: #{tpu_custom_call.1} parent=5 // pred_check
        %p1598 = pneg %p1597
      $region34: #{tpu_custom_call.1} parent=5 // pred_check_branch
        %1600 = sbr.rel (%p1598) target = $region36
      $region35: #{tpu_custom_call.1} parent=5 // pred_region
        %s1601 = ssub.s32 %s11, 2
        // Predicated region
        $region37: #{tpu_custom_call.1} parent=35 // pred_check
          %p1602 = pneg %p87
        $region38: #{tpu_custom_call.1} parent=35 // pred_check_branch
          %1604 = sbr.rel (%p1602) target = $region40
        $region39: #{tpu_custom_call.1} parent=35 // pred_region
          %s1605 = sand.u32 %s72, 1
          %s1606 = scalar_lea.sflag [#allocation3], %s1605
          %s1607 = sand.u32 %s72, 1
          %s1608 = smul.addr %s1607, 2
          %s1609 = scalar_lea.vmem [#allocation2], %s1608
          %1610 = dma.done %s1606, 32
        $region40: #{tpu_custom_call.1} parent=35 // pred_fallthru
          _
      $region36: #{tpu_custom_call.1} parent=5 // pred_fallthru
        _
    $region6: #{tpu_custom_call.1} parent=1 // loop_footer
      %s15 = sadd.s32 1, %s11
    $region7: #{tpu_custom_call.1} parent=1 // loop_footer_branch
      %10 = sbr.rel target = $region3
    $region8: #{tpu_custom_call.1} parent=1 // loop_exit
      _
    %1611 = vsyncpa [#allocation3], 1
    %s1612 = scalar_lea.sflag [#allocation3], 1
    %1613 = vsyncpa %s1612, 1

</llo_original>
